<compile_context>
chip_gen: v7x
topology: tpu7x:2x2x1
jax: 0.10.0
libtpu: 0.0.40
codegen_flags: <defaults>
</compile_context>

<pallas_src>
import functools

import numpy as np
import jax
import jax.numpy as jnp
from jax.experimental import pallas as pl
from jax.experimental.pallas import tpu as pltpu

# ----------------------------- synthetic config ------------------------------
CFG = dict(
    image_token_index=63,
    pad_token_id=0,
    ignore_index=-100,
    vision_feature_layer=-2,
    vision_feature_select_strategy="default",
)
VOCAB = 64
TEXT_D = 32          # text embedding / projector output dim
VIS_D = 32           # vision hidden dim
VIS_MLP = 64         # vision MLP intermediate dim
NUM_HEADS = 4
HEAD_D = VIS_D // NUM_HEADS
NUM_LAYERS = 2
PATCH = 8
IMG = 16
CHANNELS = 3
B, S = 2, 8          # text batch / sequence length
NUM_IMAGES = 2
LN_EPS = 1e-5
OUT_PAD = 128        # lane-dense padded projector output width

# number of encoder layers that actually feed the selected hidden state
_N_HIDDEN = NUM_LAYERS + 1
N_LAYERS_RUN = CFG["vision_feature_layer"] % _N_HIDDEN       # -2 -> 1

_SQRT2_INV = float(1.0 / np.sqrt(2.0))


# ------------------------- fused vision+projector kernel ----------------------
def _fused_vision_kernel(rows_ref, w_emb_ref, pos_ref, pre_g_ref, pre_b_ref,
                         wqkv_ref, bqkv_ref, wo_ref, bo_ref,
                         w1_ref, b1_ref, w2_ref, b2_ref,
                         pw1_ref, pb1_ref, pw2_ref, pb2_ref,
                         out_ref, *, n_heads, head_d, n_layers, eps):
    """One grid step == one image: CLIP vision tower + multi-modal projector."""
    d_model = n_heads * head_d

    def mm(x, w, b=None):
        # bf16 MXU operands, f32 accumulation
        y = jnp.dot(x.astype(jnp.bfloat16), w, preferred_element_type=jnp.float32)
        return y if b is None else y + b

    def layer_norm(x, g=None, b=None):
        mu = jnp.mean(x, axis=-1, keepdims=True)
        var = jnp.mean(jnp.square(x - mu), axis=-1, keepdims=True)
        y = (x - mu) * jax.lax.rsqrt(var + eps)
        return y if g is None else y * g + b

    # patch + CLS embedding in one matmul (CLS via indicator column), then
    # positional embedding and CLIP pre-layernorm.  x: (n_tok, D) f32.
    x = mm(rows_ref[0], w_emb_ref[...]) + pos_ref[...]
    x = layer_norm(x, pre_g_ref[...], pre_b_ref[...])

    for l in range(n_layers):
        # ----- self attention (pre-LN).  LN gamma/beta and the 1/sqrt(d) score
        # scale are folded into wqkv/bqkv at pack time, so the in-kernel LN is
        # affine-free and no per-score scaling is needed. -----
        h = layer_norm(x)
        qkv = mm(h, wqkv_ref[l], bqkv_ref[l])                    # (n_tok, 3D)
        heads = []
        for hd in range(n_heads):
            lo = hd * head_d
            q = qkv[:, lo:lo + head_d]
            k = qkv[:, d_model + lo:d_model + lo + head_d]
            v = qkv[:, 2 * d_model + lo:2 * d_model + lo + head_d]
            s = jax.lax.dot_general(
                q.astype(jnp.bfloat16), k.astype(jnp.bfloat16),
                (((1,), (1,)), ((), ())),
                preferred_element_type=jnp.float32)               # (n_tok, n_tok)
            s = s - jnp.max(s, axis=-1, keepdims=True)
            p = jnp.exp(s)
            p = p * pl.reciprocal(jnp.sum(p, axis=-1, keepdims=True), approx=True)
            heads.append(jnp.dot(p.astype(jnp.bfloat16), v.astype(jnp.bfloat16),
                                 preferred_element_type=jnp.float32))
        attn = jnp.concatenate(heads, axis=-1)                    # (n_tok, D)
        x = x + mm(attn, wo_ref[l], bo_ref[l])
        # ----- MLP (pre-LN folded into w1/b1, CLIP quick_gelu) -----
        h = layer_norm(x)
        h = mm(h, w1_ref[l], b1_ref[l])
        h = h * jax.nn.sigmoid(1.702 * h)                         # quick_gelu
        x = x + mm(h, w2_ref[l], b2_ref[l])

    # ----- multi-modal projector: Linear -> GELU(erf) -> Linear (lane-padded) -----
    h = mm(x, pw1_ref[...], pb1_ref[...])
    h = 0.5 * h * (1.0 + jax.lax.erf(h * _SQRT2_INV))             # exact GELU
    out_ref[0] = mm(h, pw2_ref[...], pb2_ref[...]).astype(out_ref.dtype)


def _full_spec(arr):
    rank = arr.ndim
    return pl.BlockSpec(arr.shape, lambda i, _r=rank: (0,) * _r)


def vision_projector_features(pixel_values, packed):
    """pixel_values: (N, C, H, W) NCHW -> image features (N, P, OUT_PAD) padded."""
    N, C, H, W = pixel_values.shape
    gh, gw = H // PATCH, W // PATCH
    gp = gh * gw
    n_tok = gp + 1
    cpp = C * PATCH * PATCH

    # patch extraction (glue): rows ordered (gh, gw), columns ordered (C, ph, pw)
    # to match torch Conv2d weight flattening.
    patches = pixel_values.reshape(N, C, gh, PATCH, gw, PATCH)
    patches = patches.transpose(0, 2, 4, 1, 3, 5).reshape(N, gp, cpp)
    # CLS handled by an indicator column so the kernel needs no token concat.
    cls_rows = jnp.concatenate(
        [jnp.zeros((N, 1, cpp), patches.dtype), jnp.ones((N, 1, 1), patches.dtype)],
        axis=-1)
    patch_rows = jnp.concatenate(
        [patches, jnp.zeros((N, gp, 1), patches.dtype)], axis=-1)
    rows = jnp.concatenate([cls_rows, patch_rows], axis=1)        # (N, n_tok, cpp+1)

    kernel = functools.partial(_fused_vision_kernel, n_heads=NUM_HEADS,
                               head_d=HEAD_D, n_layers=N_LAYERS_RUN, eps=LN_EPS)
    weight_order = ("w_emb", "pos", "pre_g", "pre_b", "wqkv", "bqkv",
                    "wo", "bo", "w1", "b1", "w2", "b2",
                    "pw1", "pb1", "pw2", "pb2")
    weights = [packed[k] for k in weight_order]

    out = pl.pallas_call(
        kernel,
        out_shape=jax.ShapeDtypeStruct((N, n_tok, OUT_PAD), jnp.float32),
        grid=(N,),
        in_specs=[pl.BlockSpec((1, n_tok, cpp + 1), lambda i: (i, 0, 0))]
                 + [_full_spec(w) for w in weights],
        out_specs=pl.BlockSpec((1, n_tok, OUT_PAD), lambda i: (i, 0, 0)),
        compiler_params=pltpu.CompilerParams(dimension_semantics=("parallel",)),
    )(rows, *weights)

    if CFG["vision_feature_select_strategy"] == "default":
        return out[:, 1:, :TEXT_D]          # drop CLS + padded lanes (glue)
    return out[:, :, :TEXT_D]


# ----------------------------- parameter handling -----------------------------
def init_params(key):
    keys = iter(jax.random.split(key, 128))

    def w(shape, scale=0.02):
        return scale * jax.random.normal(next(keys), shape, jnp.float32)

    params = {}
    params["embed_tokens"] = w((VOCAB, TEXT_D))

    num_pos = (IMG // PATCH) ** 2 + 1
    vt = dict(
        patch_w=w((CHANNELS * PATCH * PATCH, VIS_D)),   # conv weight, (C*ph*pw, VIS_D)
        cls=w((VIS_D,)),
        pos=w((num_pos, VIS_D)),
        pre_ln_g=jnp.ones((VIS_D,), jnp.float32),
        pre_ln_b=jnp.zeros((VIS_D,), jnp.float32),
        layers=[],
    )
    for _ in range(NUM_LAYERS):
        vt["layers"].append(dict(
            ln1_g=jnp.ones((VIS_D,), jnp.float32), ln1_b=jnp.zeros((VIS_D,), jnp.float32),
            wq=w((VIS_D, VIS_D)), bq=jnp.zeros((VIS_D,), jnp.float32),
            wk=w((VIS_D, VIS_D)), bk=jnp.zeros((VIS_D,), jnp.float32),
            wv=w((VIS_D, VIS_D)), bv=jnp.zeros((VIS_D,), jnp.float32),
            wo=w((VIS_D, VIS_D)), bo=jnp.zeros((VIS_D,), jnp.float32),
            ln2_g=jnp.ones((VIS_D,), jnp.float32), ln2_b=jnp.zeros((VIS_D,), jnp.float32),
            w1=w((VIS_D, VIS_MLP)), b1=jnp.zeros((VIS_MLP,), jnp.float32),
            w2=w((VIS_MLP, VIS_D)), b2=jnp.zeros((VIS_D,), jnp.float32),
        ))
    params["vision"] = vt
    params["proj"] = dict(
        w1=w((VIS_D, TEXT_D)), b1=jnp.zeros((TEXT_D,), jnp.float32),
        w2=w((TEXT_D, TEXT_D)), b2=jnp.zeros((TEXT_D,), jnp.float32),
    )
    return params


def pack_params(params):
    """One-time repack: fold LN affines + attention scale into the matmul weights."""
    vt, pj = params["vision"], params["proj"]
    layers = vt["layers"][:max(N_LAYERS_RUN, 1)]
    bf16 = lambda a: a.astype(jnp.bfloat16)
    scale = HEAD_D ** -0.5

    wqkv_l, bqkv_l, w1_l, b1_l = [], [], [], []
    for l in layers:
        g1, b1 = l["ln1_g"][:, None], l["ln1_b"]
        # ln1 affine folded into QKV; 1/sqrt(head_d) folded into the Q columns.
        wq = (g1 * l["wq"]) * scale
        bq = (b1 @ l["wq"] + l["bq"]) * scale
        wk = g1 * l["wk"]
        bk = b1 @ l["wk"] + l["bk"]
        wv = g1 * l["wv"]
        bv = b1 @ l["wv"] + l["bv"]
        wqkv_l.append(jnp.concatenate([wq, wk, wv], axis=1))       # (D, 3D)
        bqkv_l.append(jnp.concatenate([bq, bk, bv]))               # (3D,)
        # ln2 affine folded into MLP up-projection.
        g2, b2 = l["ln2_g"][:, None], l["ln2_b"]
        w1_l.append(g2 * l["w1"])
        b1_l.append(b2 @ l["w1"] + l["b1"])

    packed = dict(
        # [patch conv weight ; cls row] -> single embedding matmul
        w_emb=bf16(jnp.concatenate([vt["patch_w"], vt["cls"][None, :]], axis=0)),
        pos=vt["pos"],
        pre_g=vt["pre_ln_g"][None, :], pre_b=vt["pre_ln_b"][None, :],
        wqkv=bf16(jnp.stack(wqkv_l)),                              # (L, D, 3D)
        bqkv=jnp.stack([b[None, :] for b in bqkv_l]),              # (L, 1, 3D)
        wo=bf16(jnp.stack([l["wo"] for l in layers])),
        bo=jnp.stack([l["bo"][None, :] for l in layers]),
        w1=bf16(jnp.stack(w1_l)),
        b1=jnp.stack([b[None, :] for b in b1_l]),
        w2=bf16(jnp.stack([l["w2"] for l in layers])),
        b2=jnp.stack([l["b2"][None, :] for l in layers]),
        pw1=bf16(pj["w1"]), pb1=pj["b1"][None, :],
        # pad projector output to 128 lanes -> lane-dense (unmasked) store
        pw2=bf16(jnp.pad(pj["w2"], ((0, 0), (0, OUT_PAD - TEXT_D)))),
        pb2=jnp.pad(pj["b2"], (0, OUT_PAD - TEXT_D))[None, :],
    )
    return {"embed_tokens": params["embed_tokens"], "packed": packed}


# -------------------- merge (device-side, fixed-shape jnp glue) ---------------
def _merge_image_features(image_features, inputs_embeds, input_ids, attention_mask,
                          labels, *, max_embed_dim, left_padding):
    num_images, num_image_patches, embed_dim = image_features.shape
    batch_size, _ = input_ids.shape

    special = input_ids == CFG["image_token_index"]
    new_pos = jnp.cumsum(special.astype(jnp.int32) * (num_image_patches - 1) + 1,
                         axis=-1) - 1
    nb_image_pad = max_embed_dim - 1 - new_pos[:, -1]
    if left_padding:
        new_pos = new_pos + nb_image_pad[:, None]

    batch_idx = jnp.arange(batch_size, dtype=jnp.int32)[:, None]
    # image-token source positions scatter into a discarded trailing slot
    tgt = jnp.where(special, max_embed_dim, new_pos)

    final_emb = jnp.zeros((batch_size, max_embed_dim + 1, embed_dim), inputs_embeds.dtype)
    final_emb = final_emb.at[batch_idx, tgt].set(inputs_embeds)[:, :max_embed_dim]
    final_mask = jnp.zeros((batch_size, max_embed_dim + 1), attention_mask.dtype)
    final_mask = final_mask.at[batch_idx, tgt].set(attention_mask)[:, :max_embed_dim]
    final_labels = None
    if labels is not None:
        final_labels = jnp.full((batch_size, max_embed_dim + 1),
                                CFG["ignore_index"], input_ids.dtype)
        final_labels = final_labels.at[batch_idx, tgt].set(labels)[:, :max_embed_dim]

    # image slots: all-zero embedding rows past the left-pad region (mirrors HF logic)
    image_slots = jnp.all(final_emb == 0, axis=-1)
    image_slots = image_slots & (
        (jnp.cumsum(image_slots.astype(jnp.int32), axis=-1) - 1) >= nb_image_pad[:, None])

    flat_slots = image_slots.reshape(-1)
    img_flat = image_features.reshape(-1, embed_dim)
    src_idx = jnp.clip(jnp.cumsum(flat_slots.astype(jnp.int32)) - 1, 0,
                       img_flat.shape[0] - 1)
    final_emb = jnp.where(flat_slots[:, None], img_flat[src_idx],
                          final_emb.reshape(-1, embed_dim))
    final_emb = final_emb.reshape(batch_size, max_embed_dim, embed_dim)

    final_mask = final_mask | image_slots.astype(final_mask.dtype)
    position_ids = jnp.cumsum(final_mask, axis=-1) - 1
    position_ids = jnp.where(final_mask == 0, 1, position_ids)
    return final_emb, final_mask, final_labels, position_ids


# ------------------------------ full forward pass -----------------------------
@functools.partial(jax.jit, static_argnames=("max_embed_dim", "left_padding"))
def _forward_on_device(params, input_ids, pixel_values, attention_mask, labels,
                       max_embed_dim, left_padding):
    inputs_embeds = jnp.take(params["embed_tokens"], input_ids, axis=0)
    image_features = vision_projector_features(pixel_values, params["packed"])
    final_emb, final_mask, final_labels, position_ids = _merge_image_features(
        image_features, inputs_embeds, input_ids, attention_mask, labels,
        max_embed_dim=max_embed_dim, left_padding=left_padding)
    hidden_states = final_emb
    _, seq_length, _ = hidden_states.shape
    position_ids = position_ids.reshape(-1, seq_length).astype(jnp.int32)
    return hidden_states, final_mask, position_ids, final_labels


def llava_wrapper_forward(params, inputs):
    input_ids, pixel_values, attention_mask, labels = inputs
    if CFG["vision_feature_select_strategy"] not in ("default", "full"):
        raise ValueError(
            f"Unexpected select feature strategy: {CFG['vision_feature_select_strategy']}")

    # Host-side metadata derived only from input_ids (tiny, already resident) —
    # does NOT sync on any of the vision-tower device compute.
    ids_np = np.asarray(input_ids)
    special_np = ids_np == CFG["image_token_index"]
    gp = (pixel_values.shape[2] // PATCH) * (pixel_values.shape[3] // PATCH)
    num_image_patches = gp if CFG["vision_feature_select_strategy"] == "default" else gp + 1
    max_embed_dim = int(special_np.sum(-1).max()) * (num_image_patches - 1) + ids_np.shape[1]
    left_padding = not bool((ids_np[:, -1] == CFG["pad_token_id"]).sum())
    # TODO(synk): HF checks the zero-embedding-row count on device; we check the
    # equivalent image-token-count condition host-side to avoid a device sync.
    if int(special_np.sum()) != pixel_values.shape[0]:
        raise ValueError("Mismatch between number of image tokens and image features.")

    return _forward_on_device(params, input_ids, pixel_values, attention_mask, labels,
                              max_embed_dim=max_embed_dim, left_padding=left_padding)


# ----------------------------------- main -------------------------------------
if __name__ == "__main__":
    key = jax.random.PRNGKey(0)
    pkey, xkey = jax.random.split(key)
    params = pack_params(init_params(pkey))

    # one image token (id 63) per sequence, no pad tokens
    input_ids = jnp.array([
        [5, 12, 63, 7, 9, 21, 33, 45],
        [8, 63, 14, 3, 27, 31, 2, 6],
    ], dtype=jnp.int32)
    attention_mask = jnp.ones((B, S), dtype=jnp.int32)
    labels = input_ids
    pixel_values = jax.random.normal(xkey, (NUM_IMAGES, CHANNELS, IMG, IMG), jnp.float32)

    outs = llava_wrapper_forward(params, (input_ids, pixel_values, attention_mask, labels))
    hidden_states, attn_mask_out, position_ids, labels_out = outs
    jax.block_until_ready(hidden_states)
    jax.block_until_ready(attn_mask_out)
    jax.block_until_ready(position_ids)
    jax.block_until_ready(labels_out)

    merged_len = 1 * ((IMG // PATCH) ** 2 - 1) + S     # 11
    assert hidden_states.shape == (B, merged_len, TEXT_D)
    assert attn_mask_out.shape == (B, merged_len)
    assert position_ids.shape == (B, merged_len)
    assert labels_out.shape == (B, merged_len)
    assert bool(jnp.isfinite(hidden_states).all())
    print("KERNEL_OK")
</pallas_src>

<mosaic_0001>
module attributes {stable_mosaic.version = 11 : i64} {
  func.func @_fused_vision_kernel(%arg0: i32, %arg1: memref<1x5x193xf32, #tpu.memory_space<vmem>>, %arg2: memref<193x32xbf16, #tpu.memory_space<vmem>>, %arg3: memref<5x32xf32, #tpu.memory_space<vmem>>, %arg4: memref<1x32xf32, #tpu.memory_space<vmem>>, %arg5: memref<1x32xf32, #tpu.memory_space<vmem>>, %arg6: memref<1x32x96xbf16, #tpu.memory_space<vmem>>, %arg7: memref<1x1x96xf32, #tpu.memory_space<vmem>>, %arg8: memref<1x32x32xbf16, #tpu.memory_space<vmem>>, %arg9: memref<1x1x32xf32, #tpu.memory_space<vmem>>, %arg10: memref<1x32x64xbf16, #tpu.memory_space<vmem>>, %arg11: memref<1x1x64xf32, #tpu.memory_space<vmem>>, %arg12: memref<1x64x32xbf16, #tpu.memory_space<vmem>>, %arg13: memref<1x1x32xf32, #tpu.memory_space<vmem>>, %arg14: memref<32x32xbf16, #tpu.memory_space<vmem>>, %arg15: memref<1x32xf32, #tpu.memory_space<vmem>>, %arg16: memref<32x128xbf16, #tpu.memory_space<vmem>>, %arg17: memref<1x128xf32, #tpu.memory_space<vmem>>, %arg18: memref<1x5x128xf32, #tpu.memory_space<vmem>>) attributes {dimension_semantics = [#tpu.dimension_semantics<parallel>], iteration_bounds = array<i64: 2>, scalar_prefetch = 0 : i64, scratch_operands = 0 : i64, tpu.core_type = #tpu.core_type<tc>, window_params = [{transform_indices = @transform_0, window_bounds = array<i64: 1, 5, 193>}, {pipeline_mode = #tpu.pipeline_mode<synchronous>, transform_indices = @transform_1, window_bounds = array<i64: 193, 32>}, {pipeline_mode = #tpu.pipeline_mode<synchronous>, transform_indices = @transform_2, window_bounds = array<i64: 5, 32>}, {pipeline_mode = #tpu.pipeline_mode<synchronous>, transform_indices = @transform_3, window_bounds = array<i64: 1, 32>}, {pipeline_mode = #tpu.pipeline_mode<synchronous>, transform_indices = @transform_4, window_bounds = array<i64: 1, 32>}, {pipeline_mode = #tpu.pipeline_mode<synchronous>, transform_indices = @transform_5, window_bounds = array<i64: 1, 32, 96>}, {pipeline_mode = #tpu.pipeline_mode<synchronous>, transform_indices = @transform_6, window_bounds = array<i64: 1, 1, 96>}, {pipeline_mode = #tpu.pipeline_mode<synchronous>, transform_indices = @transform_7, window_bounds = array<i64: 1, 32, 32>}, {pipeline_mode = #tpu.pipeline_mode<synchronous>, transform_indices = @transform_8, window_bounds = array<i64: 1, 1, 32>}, {pipeline_mode = #tpu.pipeline_mode<synchronous>, transform_indices = @transform_9, window_bounds = array<i64: 1, 32, 64>}, {pipeline_mode = #tpu.pipeline_mode<synchronous>, transform_indices = @transform_10, window_bounds = array<i64: 1, 1, 64>}, {pipeline_mode = #tpu.pipeline_mode<synchronous>, transform_indices = @transform_11, window_bounds = array<i64: 1, 64, 32>}, {pipeline_mode = #tpu.pipeline_mode<synchronous>, transform_indices = @transform_12, window_bounds = array<i64: 1, 1, 32>}, {pipeline_mode = #tpu.pipeline_mode<synchronous>, transform_indices = @transform_13, window_bounds = array<i64: 32, 32>}, {pipeline_mode = #tpu.pipeline_mode<synchronous>, transform_indices = @transform_14, window_bounds = array<i64: 1, 32>}, {pipeline_mode = #tpu.pipeline_mode<synchronous>, transform_indices = @transform_15, window_bounds = array<i64: 32, 128>}, {pipeline_mode = #tpu.pipeline_mode<synchronous>, transform_indices = @transform_16, window_bounds = array<i64: 1, 128>}, {transform_indices = @transform_17, window_bounds = array<i64: 1, 5, 128>}]} {
    %c0 = arith.constant 0 : index
    %c0_0 = arith.constant 0 : index
    %c0_1 = arith.constant 0 : index
    %0 = vector.load %arg1[%c0, %c0_0, %c0_1] : memref<1x5x193xf32, #tpu.memory_space<vmem>>, vector<1x5x193xf32>
    %1 = vector.shape_cast %0 : vector<1x5x193xf32> to vector<5x193xf32>
    %c0_2 = arith.constant 0 : index
    %c0_3 = arith.constant 0 : index
    %2 = vector.load %arg2[%c0_2, %c0_3] : memref<193x32xbf16, #tpu.memory_space<vmem>>, vector<193x32xbf16>
    %3 = arith.truncf %1 : vector<5x193xf32> to vector<5x193xbf16>
    %cst = arith.constant dense<0.000000e+00> : vector<5x32xf32>
    %4 = tpu.matmul %3, %2, %cst {dimension_numbers = #tpu.dot_dimension_numbers<[1], [0], [0], [1], [0, 0, 1, 1], [], []>} : vector<5x193xbf16>, vector<193x32xbf16>, vector<5x32xf32> -> vector<5x32xf32>
    %c0_4 = arith.constant 0 : index
    %c0_5 = arith.constant 0 : index
    %5 = vector.load %arg3[%c0_4, %c0_5] : memref<5x32xf32, #tpu.memory_space<vmem>>, vector<5x32xf32>
    %6 = arith.addf %4, %5 : vector<5x32xf32>
    %c0_6 = arith.constant 0 : index
    %c0_7 = arith.constant 0 : index
    %7 = vector.load %arg4[%c0_6, %c0_7] : memref<1x32xf32, #tpu.memory_space<vmem>>, vector<1x32xf32>
    %c0_8 = arith.constant 0 : index
    %c0_9 = arith.constant 0 : index
    %8 = vector.load %arg5[%c0_8, %c0_9] : memref<1x32xf32, #tpu.memory_space<vmem>>, vector<1x32xf32>
    %cst_10 = arith.constant dense<0.000000e+00> : vector<5xf32>
    %9 = vector.multi_reduction <add>, %6, %cst_10 [1] : vector<5x32xf32> to vector<5xf32>
    %10 = vector.shape_cast %9 : vector<5xf32> to vector<5x1xf32>
    %cst_11 = arith.constant 3.200000e+01 : f32
    %11 = vector.broadcast %cst_11 : f32 to vector<5x1xf32>
    %12 = arith.divf %10, %11 : vector<5x1xf32>
    %13 = vector.broadcast %12 : vector<5x1xf32> to vector<5x32xf32>
    %14 = arith.subf %6, %13 : vector<5x32xf32>
    %15 = arith.mulf %14, %14 : vector<5x32xf32>
    %cst_12 = arith.constant dense<0.000000e+00> : vector<5xf32>
    %16 = vector.multi_reduction <add>, %15, %cst_12 [1] : vector<5x32xf32> to vector<5xf32>
    %17 = vector.shape_cast %16 : vector<5xf32> to vector<5x1xf32>
    %cst_13 = arith.constant 3.200000e+01 : f32
    %18 = vector.broadcast %cst_13 : f32 to vector<5x1xf32>
    %19 = arith.divf %17, %18 : vector<5x1xf32>
    %20 = vector.broadcast %12 : vector<5x1xf32> to vector<5x32xf32>
    %21 = arith.subf %6, %20 : vector<5x32xf32>
    %cst_14 = arith.constant 9.99999974E-6 : f32
    %22 = vector.broadcast %cst_14 : f32 to vector<5x1xf32>
    %23 = arith.addf %19, %22 : vector<5x1xf32>
    %24 = math.rsqrt %23 : vector<5x1xf32>
    %25 = vector.broadcast %24 : vector<5x1xf32> to vector<5x32xf32>
    %26 = arith.mulf %21, %25 : vector<5x32xf32>
    %27 = vector.broadcast %7 : vector<1x32xf32> to vector<5x32xf32>
    %28 = arith.mulf %26, %27 : vector<5x32xf32>
    %29 = vector.broadcast %8 : vector<1x32xf32> to vector<5x32xf32>
    %30 = arith.addf %28, %29 : vector<5x32xf32>
    %cst_15 = arith.constant dense<0.000000e+00> : vector<5xf32>
    %31 = vector.multi_reduction <add>, %30, %cst_15 [1] : vector<5x32xf32> to vector<5xf32>
    %32 = vector.shape_cast %31 : vector<5xf32> to vector<5x1xf32>
    %cst_16 = arith.constant 3.200000e+01 : f32
    %33 = vector.broadcast %cst_16 : f32 to vector<5x1xf32>
    %34 = arith.divf %32, %33 : vector<5x1xf32>
    %35 = vector.broadcast %34 : vector<5x1xf32> to vector<5x32xf32>
    %36 = arith.subf %30, %35 : vector<5x32xf32>
    %37 = arith.mulf %36, %36 : vector<5x32xf32>
    %cst_17 = arith.constant dense<0.000000e+00> : vector<5xf32>
    %38 = vector.multi_reduction <add>, %37, %cst_17 [1] : vector<5x32xf32> to vector<5xf32>
    %39 = vector.shape_cast %38 : vector<5xf32> to vector<5x1xf32>
    %cst_18 = arith.constant 3.200000e+01 : f32
    %40 = vector.broadcast %cst_18 : f32 to vector<5x1xf32>
    %41 = arith.divf %39, %40 : vector<5x1xf32>
    %42 = vector.broadcast %34 : vector<5x1xf32> to vector<5x32xf32>
    %43 = arith.subf %30, %42 : vector<5x32xf32>
    %cst_19 = arith.constant 9.99999974E-6 : f32
    %44 = vector.broadcast %cst_19 : f32 to vector<5x1xf32>
    %45 = arith.addf %41, %44 : vector<5x1xf32>
    %46 = math.rsqrt %45 : vector<5x1xf32>
    %47 = vector.broadcast %46 : vector<5x1xf32> to vector<5x32xf32>
    %48 = arith.mulf %43, %47 : vector<5x32xf32>
    %c0_20 = arith.constant 0 : index
    %c0_21 = arith.constant 0 : index
    %c0_22 = arith.constant 0 : index
    %49 = vector.load %arg6[%c0_20, %c0_21, %c0_22] : memref<1x32x96xbf16, #tpu.memory_space<vmem>>, vector<1x32x96xbf16>
    %50 = vector.shape_cast %49 : vector<1x32x96xbf16> to vector<32x96xbf16>
    %c0_23 = arith.constant 0 : index
    %c0_24 = arith.constant 0 : index
    %c0_25 = arith.constant 0 : index
    %51 = vector.load %arg7[%c0_23, %c0_24, %c0_25] : memref<1x1x96xf32, #tpu.memory_space<vmem>>, vector<1x1x96xf32>
    %52 = vector.shape_cast %51 : vector<1x1x96xf32> to vector<1x96xf32>
    %53 = arith.truncf %48 : vector<5x32xf32> to vector<5x32xbf16>
    %cst_26 = arith.constant dense<0.000000e+00> : vector<5x96xf32>
    %54 = tpu.matmul %53, %50, %cst_26 {dimension_numbers = #tpu.dot_dimension_numbers<[1], [0], [0], [1], [0, 0, 1, 1], [], []>} : vector<5x32xbf16>, vector<32x96xbf16>, vector<5x96xf32> -> vector<5x96xf32>
    %55 = vector.broadcast %52 : vector<1x96xf32> to vector<5x96xf32>
    %56 = arith.addf %54, %55 : vector<5x96xf32>
    %57 = vector.extract_strided_slice %56 {offsets = [0, 0], sizes = [5, 8], strides = [1, 1]} : vector<5x96xf32> to vector<5x8xf32>
    %58 = vector.extract_strided_slice %56 {offsets = [0, 32], sizes = [5, 8], strides = [1, 1]} : vector<5x96xf32> to vector<5x8xf32>
    %59 = vector.extract_strided_slice %56 {offsets = [0, 64], sizes = [5, 8], strides = [1, 1]} : vector<5x96xf32> to vector<5x8xf32>
    %60 = arith.truncf %57 : vector<5x8xf32> to vector<5x8xbf16>
    %61 = arith.truncf %58 : vector<5x8xf32> to vector<5x8xbf16>
    %cst_27 = arith.constant dense<0.000000e+00> : vector<5x5xf32>
    %62 = tpu.matmul %60, %61, %cst_27 {dimension_numbers = #tpu.dot_dimension_numbers<[1], [1], [0], [0], [0, 0, 1, 0], [], []>} : vector<5x8xbf16>, vector<5x8xbf16>, vector<5x5xf32> -> vector<5x5xf32>
    %cst_28 = arith.constant dense<0xFF800000> : vector<5xf32>
    %63 = vector.multi_reduction <maximumf>, %62, %cst_28 [1] : vector<5x5xf32> to vector<5xf32>
    %64 = vector.shape_cast %63 : vector<5xf32> to vector<5x1xf32>
    %65 = vector.broadcast %64 : vector<5x1xf32> to vector<5x5xf32>
    %66 = arith.subf %62, %65 : vector<5x5xf32>
    %67 = math.exp %66 : vector<5x5xf32>
    %cst_29 = arith.constant dense<0.000000e+00> : vector<5xf32>
    %68 = vector.multi_reduction <add>, %67, %cst_29 [1] : vector<5x5xf32> to vector<5xf32>
    %69 = vector.shape_cast %68 : vector<5xf32> to vector<5x1xf32>
    %70 = tpu.reciprocal %69 {approx = true} : vector<5x1xf32> -> vector<5x1xf32>
    %71 = vector.broadcast %70 : vector<5x1xf32> to vector<5x5xf32>
    %72 = arith.mulf %67, %71 : vector<5x5xf32>
    %73 = arith.truncf %72 : vector<5x5xf32> to vector<5x5xbf16>
    %74 = arith.truncf %59 : vector<5x8xf32> to vector<5x8xbf16>
    %cst_30 = arith.constant dense<0.000000e+00> : vector<5x8xf32>
    %75 = tpu.matmul %73, %74, %cst_30 {dimension_numbers = #tpu.dot_dimension_numbers<[1], [0], [0], [1], [0, 0, 1, 1], [], []>} : vector<5x5xbf16>, vector<5x8xbf16>, vector<5x8xf32> -> vector<5x8xf32>
    %76 = vector.extract_strided_slice %56 {offsets = [0, 8], sizes = [5, 8], strides = [1, 1]} : vector<5x96xf32> to vector<5x8xf32>
    %77 = vector.extract_strided_slice %56 {offsets = [0, 40], sizes = [5, 8], strides = [1, 1]} : vector<5x96xf32> to vector<5x8xf32>
    %78 = vector.extract_strided_slice %56 {offsets = [0, 72], sizes = [5, 8], strides = [1, 1]} : vector<5x96xf32> to vector<5x8xf32>
    %79 = arith.truncf %76 : vector<5x8xf32> to vector<5x8xbf16>
    %80 = arith.truncf %77 : vector<5x8xf32> to vector<5x8xbf16>
    %cst_31 = arith.constant dense<0.000000e+00> : vector<5x5xf32>
    %81 = tpu.matmul %79, %80, %cst_31 {dimension_numbers = #tpu.dot_dimension_numbers<[1], [1], [0], [0], [0, 0, 1, 0], [], []>} : vector<5x8xbf16>, vector<5x8xbf16>, vector<5x5xf32> -> vector<5x5xf32>
    %cst_32 = arith.constant dense<0xFF800000> : vector<5xf32>
    %82 = vector.multi_reduction <maximumf>, %81, %cst_32 [1] : vector<5x5xf32> to vector<5xf32>
    %83 = vector.shape_cast %82 : vector<5xf32> to vector<5x1xf32>
    %84 = vector.broadcast %83 : vector<5x1xf32> to vector<5x5xf32>
    %85 = arith.subf %81, %84 : vector<5x5xf32>
    %86 = math.exp %85 : vector<5x5xf32>
    %cst_33 = arith.constant dense<0.000000e+00> : vector<5xf32>
    %87 = vector.multi_reduction <add>, %86, %cst_33 [1] : vector<5x5xf32> to vector<5xf32>
    %88 = vector.shape_cast %87 : vector<5xf32> to vector<5x1xf32>
    %89 = tpu.reciprocal %88 {approx = true} : vector<5x1xf32> -> vector<5x1xf32>
    %90 = vector.broadcast %89 : vector<5x1xf32> to vector<5x5xf32>
    %91 = arith.mulf %86, %90 : vector<5x5xf32>
    %92 = arith.truncf %91 : vector<5x5xf32> to vector<5x5xbf16>
    %93 = arith.truncf %78 : vector<5x8xf32> to vector<5x8xbf16>
    %cst_34 = arith.constant dense<0.000000e+00> : vector<5x8xf32>
    %94 = tpu.matmul %92, %93, %cst_34 {dimension_numbers = #tpu.dot_dimension_numbers<[1], [0], [0], [1], [0, 0, 1, 1], [], []>} : vector<5x5xbf16>, vector<5x8xbf16>, vector<5x8xf32> -> vector<5x8xf32>
    %95 = vector.extract_strided_slice %56 {offsets = [0, 16], sizes = [5, 8], strides = [1, 1]} : vector<5x96xf32> to vector<5x8xf32>
    %96 = vector.extract_strided_slice %56 {offsets = [0, 48], sizes = [5, 8], strides = [1, 1]} : vector<5x96xf32> to vector<5x8xf32>
    %97 = vector.extract_strided_slice %56 {offsets = [0, 80], sizes = [5, 8], strides = [1, 1]} : vector<5x96xf32> to vector<5x8xf32>
    %98 = arith.truncf %95 : vector<5x8xf32> to vector<5x8xbf16>
    %99 = arith.truncf %96 : vector<5x8xf32> to vector<5x8xbf16>
    %cst_35 = arith.constant dense<0.000000e+00> : vector<5x5xf32>
    %100 = tpu.matmul %98, %99, %cst_35 {dimension_numbers = #tpu.dot_dimension_numbers<[1], [1], [0], [0], [0, 0, 1, 0], [], []>} : vector<5x8xbf16>, vector<5x8xbf16>, vector<5x5xf32> -> vector<5x5xf32>
    %cst_36 = arith.constant dense<0xFF800000> : vector<5xf32>
    %101 = vector.multi_reduction <maximumf>, %100, %cst_36 [1] : vector<5x5xf32> to vector<5xf32>
    %102 = vector.shape_cast %101 : vector<5xf32> to vector<5x1xf32>
    %103 = vector.broadcast %102 : vector<5x1xf32> to vector<5x5xf32>
    %104 = arith.subf %100, %103 : vector<5x5xf32>
    %105 = math.exp %104 : vector<5x5xf32>
    %cst_37 = arith.constant dense<0.000000e+00> : vector<5xf32>
    %106 = vector.multi_reduction <add>, %105, %cst_37 [1] : vector<5x5xf32> to vector<5xf32>
    %107 = vector.shape_cast %106 : vector<5xf32> to vector<5x1xf32>
    %108 = tpu.reciprocal %107 {approx = true} : vector<5x1xf32> -> vector<5x1xf32>
    %109 = vector.broadcast %108 : vector<5x1xf32> to vector<5x5xf32>
    %110 = arith.mulf %105, %109 : vector<5x5xf32>
    %111 = arith.truncf %110 : vector<5x5xf32> to vector<5x5xbf16>
    %112 = arith.truncf %97 : vector<5x8xf32> to vector<5x8xbf16>
    %cst_38 = arith.constant dense<0.000000e+00> : vector<5x8xf32>
    %113 = tpu.matmul %111, %112, %cst_38 {dimension_numbers = #tpu.dot_dimension_numbers<[1], [0], [0], [1], [0, 0, 1, 1], [], []>} : vector<5x5xbf16>, vector<5x8xbf16>, vector<5x8xf32> -> vector<5x8xf32>
    %114 = vector.extract_strided_slice %56 {offsets = [0, 24], sizes = [5, 8], strides = [1, 1]} : vector<5x96xf32> to vector<5x8xf32>
    %115 = vector.extract_strided_slice %56 {offsets = [0, 56], sizes = [5, 8], strides = [1, 1]} : vector<5x96xf32> to vector<5x8xf32>
    %116 = vector.extract_strided_slice %56 {offsets = [0, 88], sizes = [5, 8], strides = [1, 1]} : vector<5x96xf32> to vector<5x8xf32>
    %117 = arith.truncf %114 : vector<5x8xf32> to vector<5x8xbf16>
    %118 = arith.truncf %115 : vector<5x8xf32> to vector<5x8xbf16>
    %cst_39 = arith.constant dense<0.000000e+00> : vector<5x5xf32>
    %119 = tpu.matmul %117, %118, %cst_39 {dimension_numbers = #tpu.dot_dimension_numbers<[1], [1], [0], [0], [0, 0, 1, 0], [], []>} : vector<5x8xbf16>, vector<5x8xbf16>, vector<5x5xf32> -> vector<5x5xf32>
    %cst_40 = arith.constant dense<0xFF800000> : vector<5xf32>
    %120 = vector.multi_reduction <maximumf>, %119, %cst_40 [1] : vector<5x5xf32> to vector<5xf32>
    %121 = vector.shape_cast %120 : vector<5xf32> to vector<5x1xf32>
    %122 = vector.broadcast %121 : vector<5x1xf32> to vector<5x5xf32>
    %123 = arith.subf %119, %122 : vector<5x5xf32>
    %124 = math.exp %123 : vector<5x5xf32>
    %cst_41 = arith.constant dense<0.000000e+00> : vector<5xf32>
    %125 = vector.multi_reduction <add>, %124, %cst_41 [1] : vector<5x5xf32> to vector<5xf32>
    %126 = vector.shape_cast %125 : vector<5xf32> to vector<5x1xf32>
    %127 = tpu.reciprocal %126 {approx = true} : vector<5x1xf32> -> vector<5x1xf32>
    %128 = vector.broadcast %127 : vector<5x1xf32> to vector<5x5xf32>
    %129 = arith.mulf %124, %128 : vector<5x5xf32>
    %130 = arith.truncf %129 : vector<5x5xf32> to vector<5x5xbf16>
    %131 = arith.truncf %116 : vector<5x8xf32> to vector<5x8xbf16>
    %cst_42 = arith.constant dense<0.000000e+00> : vector<5x8xf32>
    %132 = tpu.matmul %130, %131, %cst_42 {dimension_numbers = #tpu.dot_dimension_numbers<[1], [0], [0], [1], [0, 0, 1, 1], [], []>} : vector<5x5xbf16>, vector<5x8xbf16>, vector<5x8xf32> -> vector<5x8xf32>
    %133 = tpu.concatenate %75, %94, %113, %132 in 1 : vector<5x8xf32>, vector<5x8xf32>, vector<5x8xf32>, vector<5x8xf32> -> vector<5x32xf32>
    %c0_43 = arith.constant 0 : index
    %c0_44 = arith.constant 0 : index
    %c0_45 = arith.constant 0 : index
    %134 = vector.load %arg8[%c0_43, %c0_44, %c0_45] : memref<1x32x32xbf16, #tpu.memory_space<vmem>>, vector<1x32x32xbf16>
    %135 = vector.shape_cast %134 : vector<1x32x32xbf16> to vector<32x32xbf16>
    %c0_46 = arith.constant 0 : index
    %c0_47 = arith.constant 0 : index
    %c0_48 = arith.constant 0 : index
    %136 = vector.load %arg9[%c0_46, %c0_47, %c0_48] : memref<1x1x32xf32, #tpu.memory_space<vmem>>, vector<1x1x32xf32>
    %137 = vector.shape_cast %136 : vector<1x1x32xf32> to vector<1x32xf32>
    %138 = arith.truncf %133 : vector<5x32xf32> to vector<5x32xbf16>
    %cst_49 = arith.constant dense<0.000000e+00> : vector<5x32xf32>
    %139 = tpu.matmul %138, %135, %cst_49 {dimension_numbers = #tpu.dot_dimension_numbers<[1], [0], [0], [1], [0, 0, 1, 1], [], []>} : vector<5x32xbf16>, vector<32x32xbf16>, vector<5x32xf32> -> vector<5x32xf32>
    %140 = vector.broadcast %137 : vector<1x32xf32> to vector<5x32xf32>
    %141 = arith.addf %139, %140 : vector<5x32xf32>
    %142 = arith.addf %30, %141 : vector<5x32xf32>
    %cst_50 = arith.constant dense<0.000000e+00> : vector<5xf32>
    %143 = vector.multi_reduction <add>, %142, %cst_50 [1] : vector<5x32xf32> to vector<5xf32>
    %144 = vector.shape_cast %143 : vector<5xf32> to vector<5x1xf32>
    %cst_51 = arith.constant 3.200000e+01 : f32
    %145 = vector.broadcast %cst_51 : f32 to vector<5x1xf32>
    %146 = arith.divf %144, %145 : vector<5x1xf32>
    %147 = vector.broadcast %146 : vector<5x1xf32> to vector<5x32xf32>
    %148 = arith.subf %142, %147 : vector<5x32xf32>
    %149 = arith.mulf %148, %148 : vector<5x32xf32>
    %cst_52 = arith.constant dense<0.000000e+00> : vector<5xf32>
    %150 = vector.multi_reduction <add>, %149, %cst_52 [1] : vector<5x32xf32> to vector<5xf32>
    %151 = vector.shape_cast %150 : vector<5xf32> to vector<5x1xf32>
    %cst_53 = arith.constant 3.200000e+01 : f32
    %152 = vector.broadcast %cst_53 : f32 to vector<5x1xf32>
    %153 = arith.divf %151, %152 : vector<5x1xf32>
    %154 = vector.broadcast %146 : vector<5x1xf32> to vector<5x32xf32>
    %155 = arith.subf %142, %154 : vector<5x32xf32>
    %cst_54 = arith.constant 9.99999974E-6 : f32
    %156 = vector.broadcast %cst_54 : f32 to vector<5x1xf32>
    %157 = arith.addf %153, %156 : vector<5x1xf32>
    %158 = math.rsqrt %157 : vector<5x1xf32>
    %159 = vector.broadcast %158 : vector<5x1xf32> to vector<5x32xf32>
    %160 = arith.mulf %155, %159 : vector<5x32xf32>
    %c0_55 = arith.constant 0 : index
    %c0_56 = arith.constant 0 : index
    %c0_57 = arith.constant 0 : index
    %161 = vector.load %arg10[%c0_55, %c0_56, %c0_57] : memref<1x32x64xbf16, #tpu.memory_space<vmem>>, vector<1x32x64xbf16>
    %162 = vector.shape_cast %161 : vector<1x32x64xbf16> to vector<32x64xbf16>
    %c0_58 = arith.constant 0 : index
    %c0_59 = arith.constant 0 : index
    %c0_60 = arith.constant 0 : index
    %163 = vector.load %arg11[%c0_58, %c0_59, %c0_60] : memref<1x1x64xf32, #tpu.memory_space<vmem>>, vector<1x1x64xf32>
    %164 = vector.shape_cast %163 : vector<1x1x64xf32> to vector<1x64xf32>
    %165 = arith.truncf %160 : vector<5x32xf32> to vector<5x32xbf16>
    %cst_61 = arith.constant dense<0.000000e+00> : vector<5x64xf32>
    %166 = tpu.matmul %165, %162, %cst_61 {dimension_numbers = #tpu.dot_dimension_numbers<[1], [0], [0], [1], [0, 0, 1, 1], [], []>} : vector<5x32xbf16>, vector<32x64xbf16>, vector<5x64xf32> -> vector<5x64xf32>
    %167 = vector.broadcast %164 : vector<1x64xf32> to vector<5x64xf32>
    %168 = arith.addf %166, %167 : vector<5x64xf32>
    %cst_62 = arith.constant 1.702000e+00 : f32
    %169 = vector.broadcast %cst_62 : f32 to vector<5x64xf32>
    %170 = arith.mulf %169, %168 : vector<5x64xf32>
    %171 = arith.negf %170 : vector<5x64xf32>
    %172 = math.exp %171 : vector<5x64xf32>
    %cst_63 = arith.constant 1.000000e+00 : f32
    %173 = vector.broadcast %cst_63 : f32 to vector<5x64xf32>
    %174 = arith.addf %173, %172 : vector<5x64xf32>
    %175 = arith.divf %173, %174 : vector<5x64xf32>
    %176 = arith.mulf %168, %175 : vector<5x64xf32>
    %c0_64 = arith.constant 0 : index
    %c0_65 = arith.constant 0 : index
    %c0_66 = arith.constant 0 : index
    %177 = vector.load %arg12[%c0_64, %c0_65, %c0_66] : memref<1x64x32xbf16, #tpu.memory_space<vmem>>, vector<1x64x32xbf16>
    %178 = vector.shape_cast %177 : vector<1x64x32xbf16> to vector<64x32xbf16>
    %c0_67 = arith.constant 0 : index
    %c0_68 = arith.constant 0 : index
    %c0_69 = arith.constant 0 : index
    %179 = vector.load %arg13[%c0_67, %c0_68, %c0_69] : memref<1x1x32xf32, #tpu.memory_space<vmem>>, vector<1x1x32xf32>
    %180 = vector.shape_cast %179 : vector<1x1x32xf32> to vector<1x32xf32>
    %181 = arith.truncf %176 : vector<5x64xf32> to vector<5x64xbf16>
    %cst_70 = arith.constant dense<0.000000e+00> : vector<5x32xf32>
    %182 = tpu.matmul %181, %178, %cst_70 {dimension_numbers = #tpu.dot_dimension_numbers<[1], [0], [0], [1], [0, 0, 1, 1], [], []>} : vector<5x64xbf16>, vector<64x32xbf16>, vector<5x32xf32> -> vector<5x32xf32>
    %183 = vector.broadcast %180 : vector<1x32xf32> to vector<5x32xf32>
    %184 = arith.addf %182, %183 : vector<5x32xf32>
    %185 = arith.addf %142, %184 : vector<5x32xf32>
    %c0_71 = arith.constant 0 : index
    %c0_72 = arith.constant 0 : index
    %186 = vector.load %arg14[%c0_71, %c0_72] : memref<32x32xbf16, #tpu.memory_space<vmem>>, vector<32x32xbf16>
    %c0_73 = arith.constant 0 : index
    %c0_74 = arith.constant 0 : index
    %187 = vector.load %arg15[%c0_73, %c0_74] : memref<1x32xf32, #tpu.memory_space<vmem>>, vector<1x32xf32>
    %188 = arith.truncf %185 : vector<5x32xf32> to vector<5x32xbf16>
    %cst_75 = arith.constant dense<0.000000e+00> : vector<5x32xf32>
    %189 = tpu.matmul %188, %186, %cst_75 {dimension_numbers = #tpu.dot_dimension_numbers<[1], [0], [0], [1], [0, 0, 1, 1], [], []>} : vector<5x32xbf16>, vector<32x32xbf16>, vector<5x32xf32> -> vector<5x32xf32>
    %190 = vector.broadcast %187 : vector<1x32xf32> to vector<5x32xf32>
    %191 = arith.addf %189, %190 : vector<5x32xf32>
    %cst_76 = arith.constant 5.000000e-01 : f32
    %192 = vector.broadcast %cst_76 : f32 to vector<5x32xf32>
    %193 = arith.mulf %192, %191 : vector<5x32xf32>
    %cst_77 = arith.constant 0.707106769 : f32
    %194 = vector.broadcast %cst_77 : f32 to vector<5x32xf32>
    %195 = arith.mulf %191, %194 : vector<5x32xf32>
    %196 = math.erf %195 : vector<5x32xf32>
    %cst_78 = arith.constant 1.000000e+00 : f32
    %197 = vector.broadcast %cst_78 : f32 to vector<5x32xf32>
    %198 = arith.addf %197, %196 : vector<5x32xf32>
    %199 = arith.mulf %193, %198 : vector<5x32xf32>
    %c0_79 = arith.constant 0 : index
    %c0_80 = arith.constant 0 : index
    %200 = vector.load %arg16[%c0_79, %c0_80] : memref<32x128xbf16, #tpu.memory_space<vmem>>, vector<32x128xbf16>
    %c0_81 = arith.constant 0 : index
    %c0_82 = arith.constant 0 : index
    %201 = vector.load %arg17[%c0_81, %c0_82] : memref<1x128xf32, #tpu.memory_space<vmem>>, vector<1x128xf32>
    %202 = arith.truncf %199 : vector<5x32xf32> to vector<5x32xbf16>
    %cst_83 = arith.constant dense<0.000000e+00> : vector<5x128xf32>
    %203 = tpu.matmul %202, %200, %cst_83 {dimension_numbers = #tpu.dot_dimension_numbers<[1], [0], [0], [1], [0, 0, 1, 1], [], []>} : vector<5x32xbf16>, vector<32x128xbf16>, vector<5x128xf32> -> vector<5x128xf32>
    %204 = vector.broadcast %201 : vector<1x128xf32> to vector<5x128xf32>
    %205 = arith.addf %203, %204 : vector<5x128xf32>
    %c0_84 = arith.constant 0 : index
    %c0_85 = arith.constant 0 : index
    %c0_86 = arith.constant 0 : index
    %206 = vector.load %arg18[%c0_84, %c0_85, %c0_86] : memref<1x5x128xf32, #tpu.memory_space<vmem>>, vector<1x5x128xf32>
    %207 = vector.shape_cast %206 : vector<1x5x128xf32> to vector<5x128xf32>
    %208 = vector.shape_cast %205 : vector<5x128xf32> to vector<1x5x128xf32>
    tpu.vector_store %arg18[%c0_84, %c0_85, %c0_86], %208 {strides = array<i32>} : memref<1x5x128xf32, #tpu.memory_space<vmem>>, vector<1x5x128xf32>,
    return
  }
  func.func @transform_0(%arg0: i32) -> (i32, i32, i32) {
    %c0_i32 = arith.constant 0 : i32
    %c0_i32_0 = arith.constant 0 : i32
    %c0_i32_1 = arith.constant 0 : i32
    return %arg0, %c0_i32, %c0_i32_0 : i32, i32, i32
  }
  func.func @transform_1(%arg0: i32) -> (i32, i32) {
    %c0_i32 = arith.constant 0 : i32
    %c0_i32_0 = arith.constant 0 : i32
    %c0_i32_1 = arith.constant 0 : i32
    return %c0_i32, %c0_i32_0 : i32, i32
  }
  func.func @transform_2(%arg0: i32) -> (i32, i32) {
    %c0_i32 = arith.constant 0 : i32
    %c0_i32_0 = arith.constant 0 : i32
    %c0_i32_1 = arith.constant 0 : i32
    return %c0_i32, %c0_i32_0 : i32, i32
  }
  func.func @transform_3(%arg0: i32) -> (i32, i32) {
    %c0_i32 = arith.constant 0 : i32
    %c0_i32_0 = arith.constant 0 : i32
    %c0_i32_1 = arith.constant 0 : i32
    return %c0_i32, %c0_i32_0 : i32, i32
  }
  func.func @transform_4(%arg0: i32) -> (i32, i32) {
    %c0_i32 = arith.constant 0 : i32
    %c0_i32_0 = arith.constant 0 : i32
    %c0_i32_1 = arith.constant 0 : i32
    return %c0_i32, %c0_i32_0 : i32, i32
  }
  func.func @transform_5(%arg0: i32) -> (i32, i32, i32) {
    %c0_i32 = arith.constant 0 : i32
    %c0_i32_0 = arith.constant 0 : i32
    %c0_i32_1 = arith.constant 0 : i32
    %c0_i32_2 = arith.constant 0 : i32
    return %c0_i32, %c0_i32_0, %c0_i32_1 : i32, i32, i32
  }
  func.func @transform_6(%arg0: i32) -> (i32, i32, i32) {
    %c0_i32 = arith.constant 0 : i32
    %c0_i32_0 = arith.constant 0 : i32
    %c0_i32_1 = arith.constant 0 : i32
    %c0_i32_2 = arith.constant 0 : i32
    return %c0_i32, %c0_i32_0, %c0_i32_1 : i32, i32, i32
  }
  func.func @transform_7(%arg0: i32) -> (i32, i32, i32) {
    %c0_i32 = arith.constant 0 : i32
    %c0_i32_0 = arith.constant 0 : i32
    %c0_i32_1 = arith.constant 0 : i32
    %c0_i32_2 = arith.constant 0 : i32
    return %c0_i32, %c0_i32_0, %c0_i32_1 : i32, i32, i32
  }
  func.func @transform_8(%arg0: i32) -> (i32, i32, i32) {
    %c0_i32 = arith.constant 0 : i32
    %c0_i32_0 = arith.constant 0 : i32
    %c0_i32_1 = arith.constant 0 : i32
    %c0_i32_2 = arith.constant 0 : i32
    return %c0_i32, %c0_i32_0, %c0_i32_1 : i32, i32, i32
  }
  func.func @transform_9(%arg0: i32) -> (i32, i32, i32) {
    %c0_i32 = arith.constant 0 : i32
    %c0_i32_0 = arith.constant 0 : i32
    %c0_i32_1 = arith.constant 0 : i32
    %c0_i32_2 = arith.constant 0 : i32
    return %c0_i32, %c0_i32_0, %c0_i32_1 : i32, i32, i32
  }
  func.func @transform_10(%arg0: i32) -> (i32, i32, i32) {
    %c0_i32 = arith.constant 0 : i32
    %c0_i32_0 = arith.constant 0 : i32
    %c0_i32_1 = arith.constant 0 : i32
    %c0_i32_2 = arith.constant 0 : i32
    return %c0_i32, %c0_i32_0, %c0_i32_1 : i32, i32, i32
  }
  func.func @transform_11(%arg0: i32) -> (i32, i32, i32) {
    %c0_i32 = arith.constant 0 : i32
    %c0_i32_0 = arith.constant 0 : i32
    %c0_i32_1 = arith.constant 0 : i32
    %c0_i32_2 = arith.constant 0 : i32
    return %c0_i32, %c0_i32_0, %c0_i32_1 : i32, i32, i32
  }
  func.func @transform_12(%arg0: i32) -> (i32, i32, i32) {
    %c0_i32 = arith.constant 0 : i32
    %c0_i32_0 = arith.constant 0 : i32
    %c0_i32_1 = arith.constant 0 : i32
    %c0_i32_2 = arith.constant 0 : i32
    return %c0_i32, %c0_i32_0, %c0_i32_1 : i32, i32, i32
  }
  func.func @transform_13(%arg0: i32) -> (i32, i32) {
    %c0_i32 = arith.constant 0 : i32
    %c0_i32_0 = arith.constant 0 : i32
    %c0_i32_1 = arith.constant 0 : i32
    return %c0_i32, %c0_i32_0 : i32, i32
  }
  func.func @transform_14(%arg0: i32) -> (i32, i32) {
    %c0_i32 = arith.constant 0 : i32
    %c0_i32_0 = arith.constant 0 : i32
    %c0_i32_1 = arith.constant 0 : i32
    return %c0_i32, %c0_i32_0 : i32, i32
  }
  func.func @transform_15(%arg0: i32) -> (i32, i32) {
    %c0_i32 = arith.constant 0 : i32
    %c0_i32_0 = arith.constant 0 : i32
    %c0_i32_1 = arith.constant 0 : i32
    return %c0_i32, %c0_i32_0 : i32, i32
  }
  func.func @transform_16(%arg0: i32) -> (i32, i32) {
    %c0_i32 = arith.constant 0 : i32
    %c0_i32_0 = arith.constant 0 : i32
    %c0_i32_1 = arith.constant 0 : i32
    return %c0_i32, %c0_i32_0 : i32, i32
  }
  func.func @transform_17(%arg0: i32) -> (i32, i32, i32) {
    %c0_i32 = arith.constant 0 : i32
    %c0_i32_0 = arith.constant 0 : i32
    %c0_i32_1 = arith.constant 0 : i32
    return %arg0, %c0_i32, %c0_i32_0 : i32, i32, i32
  }
}

</mosaic_0001>

<llo_original>
// kernel: _forward_on_device.1
$region0: #{_forward_on_device.1}
  #allocation0 [shape = 'u32[]', space=smem, size = 0x4, offset = 0x4, fixed_abs, tag = 'smem constant byte address 0x4 - core index']
  #allocation1 [shape = 'u32[144,128]{1,0:T(1,128)}', space=vmem, size = 0x12000, scoped, tag = 'internal scratch']
  %s0 = inlined_call_operand.vmem [shape: f32[2,5,193], index: 0, kind: input, shape index: {}]
  %s1 = inlined_call_operand.vmem [shape: bf16[193,32], index: 1, kind: input, shape index: {}]
  %s2 = inlined_call_operand.vmem [shape: f32[5,32], index: 2, kind: input, shape index: {}]
  %s3 = inlined_call_operand.vmem [shape: f32[1,32], index: 3, kind: input, shape index: {}]
  %s4 = inlined_call_operand.vmem [shape: f32[1,32], index: 4, kind: input, shape index: {}]
  %s5 = inlined_call_operand.vmem [shape: bf16[1,32,96], index: 5, kind: input, shape index: {}]
  %s6 = inlined_call_operand.vmem [shape: f32[1,1,96], index: 6, kind: input, shape index: {}]
  %s7 = inlined_call_operand.vmem [shape: bf16[1,32,32], index: 7, kind: input, shape index: {}]
  %s8 = inlined_call_operand.vmem [shape: f32[1,1,32], index: 8, kind: input, shape index: {}]
  %s9 = inlined_call_operand.vmem [shape: bf16[1,32,64], index: 9, kind: input, shape index: {}]
  %s10 = inlined_call_operand.vmem [shape: f32[1,1,64], index: 10, kind: input, shape index: {}]
  %s11 = inlined_call_operand.vmem [shape: bf16[1,64,32], index: 11, kind: input, shape index: {}]
  %s12 = inlined_call_operand.vmem [shape: f32[1,1,32], index: 12, kind: input, shape index: {}]
  %s13 = inlined_call_operand.vmem [shape: bf16[32,32], index: 13, kind: input, shape index: {}]
  %s14 = inlined_call_operand.vmem [shape: f32[1,32], index: 14, kind: input, shape index: {}]
  %s15 = inlined_call_operand.vmem [shape: bf16[32,128], index: 15, kind: input, shape index: {}]
  %s16 = inlined_call_operand.vmem [shape: f32[1,128], index: 16, kind: input, shape index: {}]
  %s17 = inlined_call_operand.vmem [shape: f32[2,5,128], index: 17, kind: output, shape index: {}]
  %s18 = sld [smem:[#allocation0]]
  $region101: #{_forward_on_device.1} parent=0
    _
  %s20 = ssub.s32 1, %s18
  %s21 = scalar_select 0, %s20, %s18
  loop: start=0, step=1, limit=4
  $region2: #{_forward_on_device.1} parent=0 // loop_pre_header
    _
  $region3: #{_forward_on_device.1} parent=0 // loop_header
    %s23 = sphi 0, %s27
    %p24 = scmp.ge.s32.totalorder %s23, 4
    %s33 = sphi 0, %s35
    %s36 = sphi 0, %s33
    %s37 = sphi 0, %s36
    %s53 = sphi 0, %s37
    %s57 = sphi 0, %s57
    %s59 = sphi 0, %s57
    %s60 = sphi 0, %s59
    %s74 = sphi 0, %s60
    %s78 = sphi 0, %s78
    %s80 = sphi 0, %s78
    %s81 = sphi 0, %s80
    %s95 = sphi 0, %s81
    %s99 = sphi 0, %s99
    %s101 = sphi 0, %s99
    %s102 = sphi 0, %s101
    %s116 = sphi 0, %s102
    %s120 = sphi 0, %s120
    %s122 = sphi 0, %s120
    %s123 = sphi 0, %s122
    %s137 = sphi 0, %s123
    %s141 = sphi 0, %s141
    %s143 = sphi 0, %s141
    %s144 = sphi 0, %s143
    %s158 = sphi 0, %s144
    %s162 = sphi 0, %s162
    %s164 = sphi 0, %s162
    %s165 = sphi 0, %s164
    %s179 = sphi 0, %s165
    %s183 = sphi 0, %s183
    %s185 = sphi 0, %s183
    %s186 = sphi 0, %s185
    %s200 = sphi 0, %s186
    %s204 = sphi 0, %s204
    %s206 = sphi 0, %s204
    %s207 = sphi 0, %s206
    %s221 = sphi 0, %s207
    %s225 = sphi 0, %s225
    %s227 = sphi 0, %s225
    %s228 = sphi 0, %s227
    %s242 = sphi 0, %s228
    %s246 = sphi 0, %s246
    %s248 = sphi 0, %s246
    %s249 = sphi 0, %s248
    %s263 = sphi 0, %s249
    %s267 = sphi 0, %s267
    %s269 = sphi 0, %s267
    %s270 = sphi 0, %s269
    %s284 = sphi 0, %s270
    %s288 = sphi 0, %s288
    %s290 = sphi 0, %s288
    %s291 = sphi 0, %s290
    %s305 = sphi 0, %s291
    %s309 = sphi 0, %s309
    %s311 = sphi 0, %s309
    %s312 = sphi 0, %s311
    %s326 = sphi 0, %s312
    %s330 = sphi 0, %s330
    %s332 = sphi 0, %s330
    %s333 = sphi 0, %s332
    %s347 = sphi 0, %s333
    %s351 = sphi 0, %s351
    %s353 = sphi 0, %s351
    %s354 = sphi 0, %s353
    %s368 = sphi 0, %s354
    %s372 = sphi 0, %s372
    %s374 = sphi 0, %s372
    %s375 = sphi 0, %s374
    %s389 = sphi 0, %s375
    %s395 = sphi 0, %s397
    %s398 = sphi 0, %s395
    %s399 = sphi 0, %s398
    %s415 = sphi 0, %s399
  $region4: #{_forward_on_device.1} parent=0 // loop_header_branch
    %26 = sbr.rel (%p24) target = $region8
  $region5: #{_forward_on_device.1} parent=0 // loop_body
    %s28 = ssub.s32 %s23, 1
    %s29 = ssub.s32 %s23, 2
    %s30 = sadd.s32 %s23, 1
    %s31 = ssub.s32 %s23, %s30
    %p32 = scmp.eq.s32.totalorder %s31, 0
    %s34 = sadd.s32 %s33, 1
    %s35 = scalar_select %p32, %s33, %s34
    %p38 = pneg %p32
    %p39 = scmp.eq.s32.totalorder %s23, 1
    %p40 = por %p38, %p39
    %p41 = scmp.ne.s32.totalorder %s33, %s36
    %p42 = scmp.eq.s32.totalorder %s23, 0
    %p43 = por %p41, %p42
    %p44 = scmp.ne.s32.totalorder %s33, %s36
    %p45 = scmp.eq.s32.totalorder %s28, 1
    %p46 = por %p44, %p45
    %p47 = scmp.ne.s32.totalorder %s36, %s37
    %p48 = scmp.eq.s32.totalorder %s28, 0
    %p49 = por %p47, %p48
    %p50 = scmp.ne.s32.totalorder %s36, %s37
    %p51 = scmp.eq.s32.totalorder %s29, 1
    %p52 = por %p50, %p51
    %p54 = scmp.ne.s32.totalorder %s37, %s53
    %p55 = scmp.eq.s32.totalorder %s29, 0
    %p56 = por %p54, %p55
    %s58 = sadd.s32 %s57, 1
    %p61 = scmp.eq.s32.totalorder %s23, 1
    %p62 = scmp.ne.s32.totalorder %s57, %s59
    %p63 = scmp.eq.s32.totalorder %s23, 0
    %p64 = por %p62, %p63
    %p65 = scmp.ne.s32.totalorder %s57, %s59
    %p66 = scmp.eq.s32.totalorder %s28, 1
    %p67 = por %p65, %p66
    %p68 = scmp.ne.s32.totalorder %s59, %s60
    %p69 = scmp.eq.s32.totalorder %s28, 0
    %p70 = por %p68, %p69
    %p71 = scmp.ne.s32.totalorder %s59, %s60
    %p72 = scmp.eq.s32.totalorder %s29, 1
    %p73 = por %p71, %p72
    %p75 = scmp.ne.s32.totalorder %s60, %s74
    %p76 = scmp.eq.s32.totalorder %s29, 0
    %p77 = por %p75, %p76
    %s79 = sadd.s32 %s78, 1
    %p82 = scmp.eq.s32.totalorder %s23, 1
    %p83 = scmp.ne.s32.totalorder %s78, %s80
    %p84 = scmp.eq.s32.totalorder %s23, 0
    %p85 = por %p83, %p84
    %p86 = scmp.ne.s32.totalorder %s78, %s80
    %p87 = scmp.eq.s32.totalorder %s28, 1
    %p88 = por %p86, %p87
    %p89 = scmp.ne.s32.totalorder %s80, %s81
    %p90 = scmp.eq.s32.totalorder %s28, 0
    %p91 = por %p89, %p90
    %p92 = scmp.ne.s32.totalorder %s80, %s81
    %p93 = scmp.eq.s32.totalorder %s29, 1
    %p94 = por %p92, %p93
    %p96 = scmp.ne.s32.totalorder %s81, %s95
    %p97 = scmp.eq.s32.totalorder %s29, 0
    %p98 = por %p96, %p97
    %s100 = sadd.s32 %s99, 1
    %p103 = scmp.eq.s32.totalorder %s23, 1
    %p104 = scmp.ne.s32.totalorder %s99, %s101
    %p105 = scmp.eq.s32.totalorder %s23, 0
    %p106 = por %p104, %p105
    %p107 = scmp.ne.s32.totalorder %s99, %s101
    %p108 = scmp.eq.s32.totalorder %s28, 1
    %p109 = por %p107, %p108
    %p110 = scmp.ne.s32.totalorder %s101, %s102
    %p111 = scmp.eq.s32.totalorder %s28, 0
    %p112 = por %p110, %p111
    %p113 = scmp.ne.s32.totalorder %s101, %s102
    %p114 = scmp.eq.s32.totalorder %s29, 1
    %p115 = por %p113, %p114
    %p117 = scmp.ne.s32.totalorder %s102, %s116
    %p118 = scmp.eq.s32.totalorder %s29, 0
    %p119 = por %p117, %p118
    %s121 = sadd.s32 %s120, 1
    %p124 = scmp.eq.s32.totalorder %s23, 1
    %p125 = scmp.ne.s32.totalorder %s120, %s122
    %p126 = scmp.eq.s32.totalorder %s23, 0
    %p127 = por %p125, %p126
    %p128 = scmp.ne.s32.totalorder %s120, %s122
    %p129 = scmp.eq.s32.totalorder %s28, 1
    %p130 = por %p128, %p129
    %p131 = scmp.ne.s32.totalorder %s122, %s123
    %p132 = scmp.eq.s32.totalorder %s28, 0
    %p133 = por %p131, %p132
    %p134 = scmp.ne.s32.totalorder %s122, %s123
    %p135 = scmp.eq.s32.totalorder %s29, 1
    %p136 = por %p134, %p135
    %p138 = scmp.ne.s32.totalorder %s123, %s137
    %p139 = scmp.eq.s32.totalorder %s29, 0
    %p140 = por %p138, %p139
    %s142 = sadd.s32 %s141, 1
    %p145 = scmp.eq.s32.totalorder %s23, 1
    %p146 = scmp.ne.s32.totalorder %s141, %s143
    %p147 = scmp.eq.s32.totalorder %s23, 0
    %p148 = por %p146, %p147
    %p149 = scmp.ne.s32.totalorder %s141, %s143
    %p150 = scmp.eq.s32.totalorder %s28, 1
    %p151 = por %p149, %p150
    %p152 = scmp.ne.s32.totalorder %s143, %s144
    %p153 = scmp.eq.s32.totalorder %s28, 0
    %p154 = por %p152, %p153
    %p155 = scmp.ne.s32.totalorder %s143, %s144
    %p156 = scmp.eq.s32.totalorder %s29, 1
    %p157 = por %p155, %p156
    %p159 = scmp.ne.s32.totalorder %s144, %s158
    %p160 = scmp.eq.s32.totalorder %s29, 0
    %p161 = por %p159, %p160
    %s163 = sadd.s32 %s162, 1
    %p166 = scmp.eq.s32.totalorder %s23, 1
    %p167 = scmp.ne.s32.totalorder %s162, %s164
    %p168 = scmp.eq.s32.totalorder %s23, 0
    %p169 = por %p167, %p168
    %p170 = scmp.ne.s32.totalorder %s162, %s164
    %p171 = scmp.eq.s32.totalorder %s28, 1
    %p172 = por %p170, %p171
    %p173 = scmp.ne.s32.totalorder %s164, %s165
    %p174 = scmp.eq.s32.totalorder %s28, 0
    %p175 = por %p173, %p174
    %p176 = scmp.ne.s32.totalorder %s164, %s165
    %p177 = scmp.eq.s32.totalorder %s29, 1
    %p178 = por %p176, %p177
    %p180 = scmp.ne.s32.totalorder %s165, %s179
    %p181 = scmp.eq.s32.totalorder %s29, 0
    %p182 = por %p180, %p181
    %s184 = sadd.s32 %s183, 1
    %p187 = scmp.eq.s32.totalorder %s23, 1
    %p188 = scmp.ne.s32.totalorder %s183, %s185
    %p189 = scmp.eq.s32.totalorder %s23, 0
    %p190 = por %p188, %p189
    %p191 = scmp.ne.s32.totalorder %s183, %s185
    %p192 = scmp.eq.s32.totalorder %s28, 1
    %p193 = por %p191, %p192
    %p194 = scmp.ne.s32.totalorder %s185, %s186
    %p195 = scmp.eq.s32.totalorder %s28, 0
    %p196 = por %p194, %p195
    %p197 = scmp.ne.s32.totalorder %s185, %s186
    %p198 = scmp.eq.s32.totalorder %s29, 1
    %p199 = por %p197, %p198
    %p201 = scmp.ne.s32.totalorder %s186, %s200
    %p202 = scmp.eq.s32.totalorder %s29, 0
    %p203 = por %p201, %p202
    %s205 = sadd.s32 %s204, 1
    %p208 = scmp.eq.s32.totalorder %s23, 1
    %p209 = scmp.ne.s32.totalorder %s204, %s206
    %p210 = scmp.eq.s32.totalorder %s23, 0
    %p211 = por %p209, %p210
    %p212 = scmp.ne.s32.totalorder %s204, %s206
    %p213 = scmp.eq.s32.totalorder %s28, 1
    %p214 = por %p212, %p213
    %p215 = scmp.ne.s32.totalorder %s206, %s207
    %p216 = scmp.eq.s32.totalorder %s28, 0
    %p217 = por %p215, %p216
    %p218 = scmp.ne.s32.totalorder %s206, %s207
    %p219 = scmp.eq.s32.totalorder %s29, 1
    %p220 = por %p218, %p219
    %p222 = scmp.ne.s32.totalorder %s207, %s221
    %p223 = scmp.eq.s32.totalorder %s29, 0
    %p224 = por %p222, %p223
    %s226 = sadd.s32 %s225, 1
    %p229 = scmp.eq.s32.totalorder %s23, 1
    %p230 = scmp.ne.s32.totalorder %s225, %s227
    %p231 = scmp.eq.s32.totalorder %s23, 0
    %p232 = por %p230, %p231
    %p233 = scmp.ne.s32.totalorder %s225, %s227
    %p234 = scmp.eq.s32.totalorder %s28, 1
    %p235 = por %p233, %p234
    %p236 = scmp.ne.s32.totalorder %s227, %s228
    %p237 = scmp.eq.s32.totalorder %s28, 0
    %p238 = por %p236, %p237
    %p239 = scmp.ne.s32.totalorder %s227, %s228
    %p240 = scmp.eq.s32.totalorder %s29, 1
    %p241 = por %p239, %p240
    %p243 = scmp.ne.s32.totalorder %s228, %s242
    %p244 = scmp.eq.s32.totalorder %s29, 0
    %p245 = por %p243, %p244
    %s247 = sadd.s32 %s246, 1
    %p250 = scmp.eq.s32.totalorder %s23, 1
    %p251 = scmp.ne.s32.totalorder %s246, %s248
    %p252 = scmp.eq.s32.totalorder %s23, 0
    %p253 = por %p251, %p252
    %p254 = scmp.ne.s32.totalorder %s246, %s248
    %p255 = scmp.eq.s32.totalorder %s28, 1
    %p256 = por %p254, %p255
    %p257 = scmp.ne.s32.totalorder %s248, %s249
    %p258 = scmp.eq.s32.totalorder %s28, 0
    %p259 = por %p257, %p258
    %p260 = scmp.ne.s32.totalorder %s248, %s249
    %p261 = scmp.eq.s32.totalorder %s29, 1
    %p262 = por %p260, %p261
    %p264 = scmp.ne.s32.totalorder %s249, %s263
    %p265 = scmp.eq.s32.totalorder %s29, 0
    %p266 = por %p264, %p265
    %s268 = sadd.s32 %s267, 1
    %p271 = scmp.eq.s32.totalorder %s23, 1
    %p272 = scmp.ne.s32.totalorder %s267, %s269
    %p273 = scmp.eq.s32.totalorder %s23, 0
    %p274 = por %p272, %p273
    %p275 = scmp.ne.s32.totalorder %s267, %s269
    %p276 = scmp.eq.s32.totalorder %s28, 1
    %p277 = por %p275, %p276
    %p278 = scmp.ne.s32.totalorder %s269, %s270
    %p279 = scmp.eq.s32.totalorder %s28, 0
    %p280 = por %p278, %p279
    %p281 = scmp.ne.s32.totalorder %s269, %s270
    %p282 = scmp.eq.s32.totalorder %s29, 1
    %p283 = por %p281, %p282
    %p285 = scmp.ne.s32.totalorder %s270, %s284
    %p286 = scmp.eq.s32.totalorder %s29, 0
    %p287 = por %p285, %p286
    %s289 = sadd.s32 %s288, 1
    %p292 = scmp.eq.s32.totalorder %s23, 1
    %p293 = scmp.ne.s32.totalorder %s288, %s290
    %p294 = scmp.eq.s32.totalorder %s23, 0
    %p295 = por %p293, %p294
    %p296 = scmp.ne.s32.totalorder %s288, %s290
    %p297 = scmp.eq.s32.totalorder %s28, 1
    %p298 = por %p296, %p297
    %p299 = scmp.ne.s32.totalorder %s290, %s291
    %p300 = scmp.eq.s32.totalorder %s28, 0
    %p301 = por %p299, %p300
    %p302 = scmp.ne.s32.totalorder %s290, %s291
    %p303 = scmp.eq.s32.totalorder %s29, 1
    %p304 = por %p302, %p303
    %p306 = scmp.ne.s32.totalorder %s291, %s305
    %p307 = scmp.eq.s32.totalorder %s29, 0
    %p308 = por %p306, %p307
    %s310 = sadd.s32 %s309, 1
    %p313 = scmp.eq.s32.totalorder %s23, 1
    %p314 = scmp.ne.s32.totalorder %s309, %s311
    %p315 = scmp.eq.s32.totalorder %s23, 0
    %p316 = por %p314, %p315
    %p317 = scmp.ne.s32.totalorder %s309, %s311
    %p318 = scmp.eq.s32.totalorder %s28, 1
    %p319 = por %p317, %p318
    %p320 = scmp.ne.s32.totalorder %s311, %s312
    %p321 = scmp.eq.s32.totalorder %s28, 0
    %p322 = por %p320, %p321
    %p323 = scmp.ne.s32.totalorder %s311, %s312
    %p324 = scmp.eq.s32.totalorder %s29, 1
    %p325 = por %p323, %p324
    %p327 = scmp.ne.s32.totalorder %s312, %s326
    %p328 = scmp.eq.s32.totalorder %s29, 0
    %p329 = por %p327, %p328
    %s331 = sadd.s32 %s330, 1
    %p334 = scmp.eq.s32.totalorder %s23, 1
    %p335 = scmp.ne.s32.totalorder %s330, %s332
    %p336 = scmp.eq.s32.totalorder %s23, 0
    %p337 = por %p335, %p336
    %p338 = scmp.ne.s32.totalorder %s330, %s332
    %p339 = scmp.eq.s32.totalorder %s28, 1
    %p340 = por %p338, %p339
    %p341 = scmp.ne.s32.totalorder %s332, %s333
    %p342 = scmp.eq.s32.totalorder %s28, 0
    %p343 = por %p341, %p342
    %p344 = scmp.ne.s32.totalorder %s332, %s333
    %p345 = scmp.eq.s32.totalorder %s29, 1
    %p346 = por %p344, %p345
    %p348 = scmp.ne.s32.totalorder %s333, %s347
    %p349 = scmp.eq.s32.totalorder %s29, 0
    %p350 = por %p348, %p349
    %s352 = sadd.s32 %s351, 1
    %p355 = scmp.eq.s32.totalorder %s23, 1
    %p356 = scmp.ne.s32.totalorder %s351, %s353
    %p357 = scmp.eq.s32.totalorder %s23, 0
    %p358 = por %p356, %p357
    %p359 = scmp.ne.s32.totalorder %s351, %s353
    %p360 = scmp.eq.s32.totalorder %s28, 1
    %p361 = por %p359, %p360
    %p362 = scmp.ne.s32.totalorder %s353, %s354
    %p363 = scmp.eq.s32.totalorder %s28, 0
    %p364 = por %p362, %p363
    %p365 = scmp.ne.s32.totalorder %s353, %s354
    %p366 = scmp.eq.s32.totalorder %s29, 1
    %p367 = por %p365, %p366
    %p369 = scmp.ne.s32.totalorder %s354, %s368
    %p370 = scmp.eq.s32.totalorder %s29, 0
    %p371 = por %p369, %p370
    %s373 = sadd.s32 %s372, 1
    %p376 = scmp.eq.s32.totalorder %s23, 1
    %p377 = scmp.ne.s32.totalorder %s372, %s374
    %p378 = scmp.eq.s32.totalorder %s23, 0
    %p379 = por %p377, %p378
    %p380 = scmp.ne.s32.totalorder %s372, %s374
    %p381 = scmp.eq.s32.totalorder %s28, 1
    %p382 = por %p380, %p381
    %p383 = scmp.ne.s32.totalorder %s374, %s375
    %p384 = scmp.eq.s32.totalorder %s28, 0
    %p385 = por %p383, %p384
    %p386 = scmp.ne.s32.totalorder %s374, %s375
    %p387 = scmp.eq.s32.totalorder %s29, 1
    %p388 = por %p386, %p387
    %p390 = scmp.ne.s32.totalorder %s375, %s389
    %p391 = scmp.eq.s32.totalorder %s29, 0
    %p392 = por %p390, %p391
    %s393 = ssub.s32 %s23, %s30
    %p394 = scmp.eq.s32.totalorder %s393, 0
    %s396 = sadd.s32 %s395, 1
    %s397 = scalar_select %p394, %s395, %s396
    %p400 = pneg %p394
    %p401 = scmp.eq.s32.totalorder %s23, 1
    %p402 = por %p400, %p401
    %p403 = scmp.ne.s32.totalorder %s395, %s398
    %p404 = scmp.eq.s32.totalorder %s23, 0
    %p405 = por %p403, %p404
    %p406 = scmp.ne.s32.totalorder %s395, %s398
    %p407 = scmp.eq.s32.totalorder %s28, 1
    %p408 = por %p406, %p407
    %p409 = scmp.ne.s32.totalorder %s398, %s399
    %p410 = scmp.eq.s32.totalorder %s28, 0
    %p411 = por %p409, %p410
    %p412 = scmp.ne.s32.totalorder %s398, %s399
    %p413 = scmp.eq.s32.totalorder %s29, 1
    %p414 = por %p412, %p413
    %p416 = scmp.ne.s32.totalorder %s399, %s415
    %p417 = scmp.eq.s32.totalorder %s29, 0
    %p418 = por %p416, %p417
    %p419 = scmp.le.s32.totalorder 1, %s23
    %p420 = scmp.lt.s32.totalorder %s23, 3
    %p421 = pnand %p419, %p420
    %p422 = pneg %p421
    // Predicated region
    $region9: #{_forward_on_device.1} parent=5 // pred_check
      _
    $region10: #{_forward_on_device.1} parent=5 // pred_check_branch
      %424 = sbr.rel (%p421) target = $region12
    $region11: #{_forward_on_device.1} parent=5 // pred_region
      %s425 = ssub.s32 %s23, 1
      // Predicated region
      $region13: #{_forward_on_device.1} parent=11 // pred_check
        %p426 = pneg %p70
      $region14: #{_forward_on_device.1} parent=11 // pred_check_branch
        %428 = sbr.rel (%p426) target = $region16
      $region15: #{_forward_on_device.1} parent=11 // pred_region
        _
      $region16: #{_forward_on_device.1} parent=11 // pred_fallthru
        _
      // Predicated region
      $region17: #{_forward_on_device.1} parent=11 // pred_check
        %p429 = pneg %p91
      $region18: #{_forward_on_device.1} parent=11 // pred_check_branch
        %431 = sbr.rel (%p429) target = $region20
      $region19: #{_forward_on_device.1} parent=11 // pred_region
        _
      $region20: #{_forward_on_device.1} parent=11 // pred_fallthru
        _
      // Predicated region
      $region21: #{_forward_on_device.1} parent=11 // pred_check
        %p432 = pneg %p112
      $region22: #{_forward_on_device.1} parent=11 // pred_check_branch
        %434 = sbr.rel (%p432) target = $region24
      $region23: #{_forward_on_device.1} parent=11 // pred_region
        _
      $region24: #{_forward_on_device.1} parent=11 // pred_fallthru
        _
      // Predicated region
      $region25: #{_forward_on_device.1} parent=11 // pred_check
        %p435 = pneg %p133
      $region26: #{_forward_on_device.1} parent=11 // pred_check_branch
        %437 = sbr.rel (%p435) target = $region28
      $region27: #{_forward_on_device.1} parent=11 // pred_region
        _
      $region28: #{_forward_on_device.1} parent=11 // pred_fallthru
        _
      // Predicated region
      $region29: #{_forward_on_device.1} parent=11 // pred_check
        %p438 = pneg %p154
      $region30: #{_forward_on_device.1} parent=11 // pred_check_branch
        %440 = sbr.rel (%p438) target = $region32
      $region31: #{_forward_on_device.1} parent=11 // pred_region
        _
      $region32: #{_forward_on_device.1} parent=11 // pred_fallthru
        _
      // Predicated region
      $region33: #{_forward_on_device.1} parent=11 // pred_check
        %p441 = pneg %p175
      $region34: #{_forward_on_device.1} parent=11 // pred_check_branch
        %443 = sbr.rel (%p441) target = $region36
      $region35: #{_forward_on_device.1} parent=11 // pred_region
        _
      $region36: #{_forward_on_device.1} parent=11 // pred_fallthru
        _
      // Predicated region
      $region37: #{_forward_on_device.1} parent=11 // pred_check
        %p444 = pneg %p196
      $region38: #{_forward_on_device.1} parent=11 // pred_check_branch
        %446 = sbr.rel (%p444) target = $region40
      $region39: #{_forward_on_device.1} parent=11 // pred_region
        _
      $region40: #{_forward_on_device.1} parent=11 // pred_fallthru
        _
      // Predicated region
      $region41: #{_forward_on_device.1} parent=11 // pred_check
        %p447 = pneg %p217
      $region42: #{_forward_on_device.1} parent=11 // pred_check_branch
        %449 = sbr.rel (%p447) target = $region44
      $region43: #{_forward_on_device.1} parent=11 // pred_region
        _
      $region44: #{_forward_on_device.1} parent=11 // pred_fallthru
        _
      // Predicated region
      $region45: #{_forward_on_device.1} parent=11 // pred_check
        %p450 = pneg %p238
      $region46: #{_forward_on_device.1} parent=11 // pred_check_branch
        %452 = sbr.rel (%p450) target = $region48
      $region47: #{_forward_on_device.1} parent=11 // pred_region
        _
      $region48: #{_forward_on_device.1} parent=11 // pred_fallthru
        _
      // Predicated region
      $region49: #{_forward_on_device.1} parent=11 // pred_check
        %p453 = pneg %p259
      $region50: #{_forward_on_device.1} parent=11 // pred_check_branch
        %455 = sbr.rel (%p453) target = $region52
      $region51: #{_forward_on_device.1} parent=11 // pred_region
        _
      $region52: #{_forward_on_device.1} parent=11 // pred_fallthru
        _
      // Predicated region
      $region53: #{_forward_on_device.1} parent=11 // pred_check
        %p456 = pneg %p280
      $region54: #{_forward_on_device.1} parent=11 // pred_check_branch
        %458 = sbr.rel (%p456) target = $region56
      $region55: #{_forward_on_device.1} parent=11 // pred_region
        _
      $region56: #{_forward_on_device.1} parent=11 // pred_fallthru
        _
      // Predicated region
      $region57: #{_forward_on_device.1} parent=11 // pred_check
        %p459 = pneg %p301
      $region58: #{_forward_on_device.1} parent=11 // pred_check_branch
        %461 = sbr.rel (%p459) target = $region60
      $region59: #{_forward_on_device.1} parent=11 // pred_region
        _
      $region60: #{_forward_on_device.1} parent=11 // pred_fallthru
        _
      // Predicated region
      $region61: #{_forward_on_device.1} parent=11 // pred_check
        %p462 = pneg %p322
      $region62: #{_forward_on_device.1} parent=11 // pred_check_branch
        %464 = sbr.rel (%p462) target = $region64
      $region63: #{_forward_on_device.1} parent=11 // pred_region
        _
      $region64: #{_forward_on_device.1} parent=11 // pred_fallthru
        _
      // Predicated region
      $region65: #{_forward_on_device.1} parent=11 // pred_check
        %p465 = pneg %p343
      $region66: #{_forward_on_device.1} parent=11 // pred_check_branch
        %467 = sbr.rel (%p465) target = $region68
      $region67: #{_forward_on_device.1} parent=11 // pred_region
        _
      $region68: #{_forward_on_device.1} parent=11 // pred_fallthru
        _
      // Predicated region
      $region69: #{_forward_on_device.1} parent=11 // pred_check
        %p468 = pneg %p364
      $region70: #{_forward_on_device.1} parent=11 // pred_check_branch
        %470 = sbr.rel (%p468) target = $region72
      $region71: #{_forward_on_device.1} parent=11 // pred_region
        _
      $region72: #{_forward_on_device.1} parent=11 // pred_fallthru
        _
      // Predicated region
      $region73: #{_forward_on_device.1} parent=11 // pred_check
        %p471 = pneg %p385
      $region74: #{_forward_on_device.1} parent=11 // pred_check_branch
        %473 = sbr.rel (%p471) target = $region76
      $region75: #{_forward_on_device.1} parent=11 // pred_region
        _
      $region76: #{_forward_on_device.1} parent=11 // pred_fallthru
        _
    $region12: #{_forward_on_device.1} parent=5 // pred_fallthru
      _
    %p474 = scmp.lt.s32.totalorder %s23, 2
    // Predicated region
    $region77: #{_forward_on_device.1} parent=5 // pred_check
      %p475 = pneg %p474
    $region78: #{_forward_on_device.1} parent=5 // pred_check_branch
      %477 = sbr.rel (%p475) target = $region80
    $region79: #{_forward_on_device.1} parent=5 // pred_region
      // Predicated region
      $region81: #{_forward_on_device.1} parent=79 // pred_check
        %p478 = pneg %p43
      $region82: #{_forward_on_device.1} parent=79 // pred_check_branch
        %480 = sbr.rel (%p478) target = $region84
      $region83: #{_forward_on_device.1} parent=79 // pred_region
        %p481 = scmp.lt.s32.totalorder %s23, 1
        %s482 = scalar_select %p481, %s23, 1
        %s483 = smul.addr %s482, 2
        %s484 = smul.addr %s483, 8
        %s485 = scalar_lea.vmem %s0, %s484
      $region84: #{_forward_on_device.1} parent=79 // pred_fallthru
        _
    $region80: #{_forward_on_device.1} parent=5 // pred_fallthru
      _
    %p486 = scmp.le.s32.totalorder 1, %s23
    %p487 = scmp.lt.s32.totalorder %s23, 3
    %p488 = pnand %p486, %p487
    %p489 = pneg %p488
    // Predicated region
    $region85: #{_forward_on_device.1} parent=5 // pred_check
      _
    $region86: #{_forward_on_device.1} parent=5 // pred_check_branch
      %491 = sbr.rel (%p488) target = $region88
    $region87: #{_forward_on_device.1} parent=5 // pred_region
      %s492 = ssub.s32 %s23, 1
      %p493 = scmp.lt.s32.totalorder %s28, 1
      %s494 = scalar_select %p493, %s28, 1
      %s495 = smul.addr %s494, 2
      %s496 = smul.addr %s495, 8
      %s497 = scalar_lea.vmem %s0, %s496
      %p498 = pneg %p49
      %p499 = pneg %p46
      %p500 = pneg %p70
      %p501 = pneg %p67
      %p502 = pneg %p91
      %p503 = pneg %p88
      %p504 = pneg %p112
      %p505 = pneg %p109
      %p506 = pneg %p133
      %p507 = pneg %p130
      %p508 = pneg %p154
      %p509 = pneg %p151
      %p510 = pneg %p175
      %p511 = pneg %p172
      %p512 = pneg %p196
      %p513 = pneg %p193
      %p514 = pneg %p217
      %p515 = pneg %p214
      %p516 = pneg %p238
      %p517 = pneg %p235
      %p518 = pneg %p259
      %p519 = pneg %p256
      %p520 = pneg %p280
      %p521 = pneg %p277
      %p522 = pneg %p301
      %p523 = pneg %p298
      %p524 = pneg %p322
      %p525 = pneg %p319
      %p526 = pneg %p343
      %p527 = pneg %p340
      %p528 = pneg %p364
      %p529 = pneg %p361
      %p530 = pneg %p385
      %p531 = pneg %p382
      %p532 = pneg %p411
      %p533 = pneg %p408
      %p534 = scmp.lt.s32.totalorder %s28, 1
      %s535 = scalar_select %p534, %s28, 1
      %s536 = smul.addr %s535, 8
      %s537 = scalar_lea.vmem %s17, %s536
      %p538 = scmp.lt.s32.totalorder %s28, 1
      %s539 = scalar_select %p538, %s28, 1
      %s540 = smul.addr %s539, 2
      %s541 = smul.addr %s540, 8
      %s542 = scalar_lea.vmem %s0, %s541
      %p543 = scmp.lt.s32.totalorder %s28, 1
      %s544 = scalar_select %p543, %s28, 1
      %s545 = smul.addr %s544, 8
      %s546 = scalar_lea.vmem %s17, %s545
      %v548 = vld [vmem:[%s542] sm:$0x1f]
      %v549 = vld [vmem:[%s542 + $0x8] sm:$0x1f]
      %v550 = vld [vmem:[%s1] sm:$0xf]
      %v551 = vld [vmem:[%s1 + $0x4] sm:$0xf]
      %v552 = vld [vmem:[%s1 + $0x8] sm:$0xf]
      %v553 = vld [vmem:[%s1 + $0xc] sm:$0xf]
      %v554 = vld [vmem:[%s1 + $0x10] sm:$0xf]
      %v555 = vld [vmem:[%s1 + $0x14] sm:$0xf]
      %v556 = vld [vmem:[%s1 + $0x18] sm:$0xf]
      %v557 = vld [vmem:[%s1 + $0x1c] sm:$0xf]
      %v558 = vld [vmem:[%s1 + $0x20] sm:$0xf]
      %v559 = vld [vmem:[%s1 + $0x24] sm:$0xf]
      %v560 = vld [vmem:[%s1 + $0x28] sm:$0xf]
      %v561 = vld [vmem:[%s1 + $0x2c] sm:$0xf]
      %v562 = vld [vmem:[%s1 + $0x30] sm:$0xf]
      %v563 = vld [vmem:[%s1 + $0x34] sm:$0xf]
      %v564 = vld [vmem:[%s1 + $0x38] sm:$0xf]
      %v565 = vld [vmem:[%s1 + $0x3c] sm:$0xf]
      %v566 = vld [vmem:[%s1 + $0x40] sm:$0xf]
      %v567 = vld [vmem:[%s1 + $0x44] sm:$0xf]
      %v568 = vld [vmem:[%s1 + $0x48] sm:$0xf]
      %v569 = vld [vmem:[%s1 + $0x4c] sm:$0xf]
      %v570 = vld [vmem:[%s1 + $0x50] sm:$0xf]
      %v571 = vld [vmem:[%s1 + $0x54] sm:$0xf]
      %v572 = vld [vmem:[%s1 + $0x58] sm:$0xf]
      %v573 = vld [vmem:[%s1 + $0x5c] sm:$0xf]
      %v574 = vld [vmem:[%s1 + $0x60] sm:$0x1]
      %v575 = vpack.c.bf16 %v548, %v548
      %v576 = vpack.c.bf16 %v549, %v549
      %v577 = vld [vmem:[%s2] sm:$0x1f]
      %v603 = vunpack.c.l.b16 %v550
      %v604 = vunpack.c.l.b16 %v551
      %v605 = vunpack.c.l.b16 %v552
      %v606 = vunpack.c.l.b16 %v553
      %v607 = vunpack.c.l.b16 %v554
      %v608 = vunpack.c.l.b16 %v555
      %v609 = vunpack.c.l.b16 %v556
      %v610 = vunpack.c.l.b16 %v557
      %v611 = vunpack.c.l.b16 %v558
      %v612 = vunpack.c.l.b16 %v559
      %v613 = vunpack.c.l.b16 %v560
      %v614 = vunpack.c.l.b16 %v561
      %v615 = vunpack.c.l.b16 %v562
      %v616 = vunpack.c.l.b16 %v563
      %v617 = vunpack.c.l.b16 %v564
      %v618 = vunpack.c.l.b16 %v565
      %v619 = vunpack.c.l.b16 %v566
      %v620 = vunpack.c.l.b16 %v567
      %v621 = vunpack.c.l.b16 %v568
      %v622 = vunpack.c.l.b16 %v569
      %v623 = vunpack.c.l.b16 %v570
      %v624 = vunpack.c.l.b16 %v571
      %v625 = vunpack.c.l.b16 %v572
      %v626 = vunpack.c.l.b16 %v573
      %v627 = vunpack.c.l.b16 %v574
      %v628 = vpack.c.b16 %v604, %v603
      %v629 = vpack.c.b16 %v606, %v605
      %v630 = vpack.c.b16 %v608, %v607
      %v631 = vpack.c.b16 %v610, %v609
      %v632 = vpack.c.b16 %v612, %v611
      %v633 = vpack.c.b16 %v614, %v613
      %v634 = vpack.c.b16 %v616, %v615
      %v635 = vpack.c.b16 %v618, %v617
      %v636 = vpack.c.b16 %v620, %v619
      %v637 = vpack.c.b16 %v622, %v621
      %v638 = vpack.c.b16 %v624, %v623
      %v639 = vpack.c.b16 %v626, %v625
      %v640 = vpack.c.b16 %v627, %v627
      %vm653 = vcmask 531456
      %v655 = vsel %vm653, %v576, 0
      %vm657 = vcmask 1040384
      %v658 = vsel 0, 4294967295, 65535
      %v659 = vsel %vm657, %v658, 0
      %v661 = vand.u32 %v640, %v659
      %663 = vmatprep.subr.bf16.mxu0 0
      %664 = vmatpush1.bf16.msra.mxu0 %v628
      %665 = vmatprep.subr.bf16.mxu0 0
      %666 = vmatpush1.bf16.msra.mxu0 %v629
      %667 = vmatprep.subr.bf16.mxu0 0
      %668 = vmatpush1.bf16.msra.mxu0 %v630
      %669 = vmatprep.subr.bf16.mxu0 0
      %670 = vmatpush1.bf16.msra.mxu0 %v631
      %671 = vmatprep.subr.bf16.mxu0 0
      %672 = vmatpush1.bf16.msra.mxu0 %v632
      %673 = vmatprep.subr.bf16.mxu0 0
      %674 = vmatpush1.bf16.msra.mxu0 %v633
      %675 = vmatprep.subr.bf16.mxu0 0
      %676 = vmatpush1.bf16.msra.mxu0 %v634
      %677 = vmatprep.subr.bf16.mxu0 0
      %678 = vmatpush1.bf16.msra.mxu0 %v635
      %679 = vmatprep.subr.bf16.mxu0 0
      %680 = vmatpush1.bf16.msra.mxu0 %v636
      %681 = vmatprep.subr.bf16.mxu0 0
      %682 = vmatpush1.bf16.msra.mxu0 %v637
      %683 = vmatprep.subr.bf16.mxu0 0
      %684 = vmatpush1.bf16.msra.mxu0 %v638
      %685 = vmatprep.subr.bf16.mxu0 0
      %686 = vmatpush1.bf16.msra.mxu0 %v639
      %687 = vmatprep.subr.bf16.mxu0 0
      %688 = vmatpush1.bf16.msra.mxu0 %v661
      %689 = vmatprep.subr.bf16.mxu0 0
      %690 = vmatpush1.bf16.msra.mxu0 0
      %691 = vmatprep.subr.bf16.mxu0 0
      %692 = vmatpush1.bf16.msra.mxu0 0
      %693 = vmatprep.subr.bf16.mxu0 0
      %694 = vmatpush1.bf16.msra.mxu0 0
      %695 = vmatprep.mubr.bf16.mxu0 %v655
      %696 = vmatmul.mubr.bf16.gmra.mrb[0].mxu0 %v575
      %v697 = vpop.f32.mrb[0].mxu0
      %v698 = vadd.f32 %v577, %v697
      %v699 = vpop.f32.mrb[0].mxu0
      %v700 = vpop.f32.mrb[0].mxu0
      %v701 = vpop.f32.mrb[0].mxu0
      %702 = vdwg.mxu0
      %v703 = vld [vmem:[%s3] sm:$0x1]
      %v704 = vld [vmem:[%s4] sm:$0x1]
      %vm705 = vcmask 258048
      %v706 = vsel %vm705, %v698, 0.0
      %707 = vadd.xlane.f32.xlu0 %v706
      %v708 = vpop.xlane.xlu0 %707
      %v709 = vrcp.pop 32.0
      %v710 = vmul.f32 %v708, %v709
      %v711 = vsub.f32 %v698, %v710
      %v712 = vmul.f32 %v711, %v711
      %v713 = vsel %vm705, %v712, 0.0
      %714 = vadd.xlane.f32.xlu0 %v713
      %v715 = vpop.xlane.xlu0 %714
      %v716 = vmul.f32 %v715, %v709
      %v717 = vadd.f32 %v716, 1e-05
      %v718 = vrsqrt.pop %v717
      %v719 = vmul.f32 %v711, %v718
      %v721 = vlaneseq
      %v722 = vshrl.u32 %v721, 7
      %v723 = vsub.s32 0, %v722
      %v724 = vrot.slane %v703, %v723
      %v726 = vmul.f32 %v719, %v724
      %v728 = vlaneseq
      %v729 = vshrl.u32 %v728, 7
      %v730 = vsub.s32 0, %v729
      %v731 = vrot.slane %v704, %v730
      %v733 = vadd.f32 %v726, %v731
      %v734 = vsel %vm705, %v733, 0.0
      %735 = vadd.xlane.f32.xlu0 %v734
      %v736 = vpop.xlane.xlu0 %735
      %v737 = vmul.f32 %v736, %v709
      %v738 = vsub.f32 %v733, %v737
      %v739 = vmul.f32 %v738, %v738
      %v740 = vsel %vm705, %v739, 0.0
      %741 = vadd.xlane.f32.xlu0 %v740
      %v742 = vpop.xlane.xlu0 %741
      %v743 = vmul.f32 %v742, %v709
      %v744 = vadd.f32 %v743, 1e-05
      %v745 = vrsqrt.pop %v744
      %v746 = vmul.f32 %v738, %v745
      %v747 = vld [vmem:[%s5] sm:$0xf]
      %v748 = vld [vmem:[%s5 + $0x4] sm:$0xf]
      %v749 = vld [vmem:[%s5 + $0x8] sm:$0xf]
      %v750 = vld [vmem:[%s5 + $0xc] sm:$0xf]
      %v751 = vld [vmem:[%s6] sm:$0x1]
      %v752 = vpack.c.bf16 %v746, %v746
      %v754 = vlaneseq
      %v755 = vshrl.u32 %v754, 7
      %v756 = vsub.s32 0, %v755
      %v757 = vrot.slane %v751, %v756
      %v763 = vunpack.c.l.b16 %v747
      %v764 = vunpack.c.l.b16 %v748
      %v765 = vunpack.c.l.b16 %v749
      %v766 = vunpack.c.l.b16 %v750
      %v767 = vpack.c.b16 %v764, %v763
      %v768 = vpack.c.b16 %v766, %v765
      %vm771 = vcmask 261120
      %v773 = vsel %vm771, %v752, 0
      %775 = vmatprep.subr.bf16.mxu0 0
      %776 = vmatpush1.bf16.msra.mxu0 %v767
      %777 = vmatprep.subr.bf16.mxu0 0
      %778 = vmatpush1.bf16.msra.mxu0 %v768
      %779 = vmatprep.subr.bf16.mxu0 0
      %780 = vmatpush1.bf16.msra.mxu0 0
      %781 = vmatprep.subr.bf16.mxu0 0
      %782 = vmatpush1.bf16.msra.mxu0 0
      %783 = vmatprep.subr.bf16.mxu0 0
      %784 = vmatpush1.bf16.msra.mxu0 0
      %785 = vmatprep.subr.bf16.mxu0 0
      %786 = vmatpush1.bf16.msra.mxu0 0
      %787 = vmatprep.subr.bf16.mxu0 0
      %788 = vmatpush1.bf16.msra.mxu0 0
      %789 = vmatprep.subr.bf16.mxu0 0
      %790 = vmatpush1.bf16.msra.mxu0 0
      %791 = vmatprep.subr.bf16.mxu0 0
      %792 = vmatpush1.bf16.msra.mxu0 0
      %793 = vmatprep.subr.bf16.mxu0 0
      %794 = vmatpush1.bf16.msra.mxu0 0
      %795 = vmatprep.subr.bf16.mxu0 0
      %796 = vmatpush1.bf16.msra.mxu0 0
      %797 = vmatprep.subr.bf16.mxu0 0
      %798 = vmatpush1.bf16.msra.mxu0 0
      %799 = vmatprep.subr.bf16.mxu0 0
      %800 = vmatpush1.bf16.msra.mxu0 0
      %801 = vmatprep.subr.bf16.mxu0 0
      %802 = vmatpush1.bf16.msra.mxu0 0
      %803 = vmatprep.subr.bf16.mxu0 0
      %804 = vmatpush1.bf16.msra.mxu0 0
      %805 = vmatprep.subr.bf16.mxu0 0
      %806 = vmatpush1.bf16.msra.mxu0 0
      %807 = vmatprep.mubr.bf16.mxu0 0
      %808 = vmatmul.mubr.bf16.gmra.mrb[0].mxu0 %v773
      %v809 = vpop.f32.mrb[0].mxu0
      %v810 = vadd.f32 %v757, %v809
      %v811 = vpop.f32.mrb[0].mxu0
      %v812 = vpop.f32.mrb[0].mxu0
      %v813 = vpop.f32.mrb[0].mxu0
      %814 = vdwg.mxu0
      %v815 = vpack.c.bf16 %v810, %v810
      %817 = vrot.lane.b32.xlu0 %v815, 96
      %v818 = vpop.permute.xlu0 %817
      %vm819 = vcmask 64512
      %v821 = vsel %vm819, %v815, 0
      %v824 = vsel %vm819, %v818, 0
      %826 = vmatprep.subr.bf16.mxu0 0
      %827 = vmatpush1.bf16.xpose.msra.mxu0 %v824
      %828 = vmatprep.subr.bf16.mxu0 0
      %829 = vmatpush1.bf16.xpose.msra.mxu0 0
      %830 = vmatprep.subr.bf16.mxu0 0
      %831 = vmatpush1.bf16.xpose.msra.mxu0 0
      %832 = vmatprep.subr.bf16.mxu0 0
      %833 = vmatpush1.bf16.xpose.msra.mxu0 0
      %834 = vmatprep.subr.bf16.mxu0 0
      %835 = vmatpush1.bf16.xpose.msra.mxu0 0
      %836 = vmatprep.subr.bf16.mxu0 0
      %837 = vmatpush1.bf16.xpose.msra.mxu0 0
      %838 = vmatprep.subr.bf16.mxu0 0
      %839 = vmatpush1.bf16.xpose.msra.mxu0 0
      %840 = vmatprep.subr.bf16.mxu0 0
      %841 = vmatpush1.bf16.xpose.msra.mxu0 0
      %842 = vmatprep.subr.bf16.mxu0 0
      %843 = vmatpush1.bf16.xpose.msra.mxu0 0
      %844 = vmatprep.subr.bf16.mxu0 0
      %845 = vmatpush1.bf16.xpose.msra.mxu0 0
      %846 = vmatprep.subr.bf16.mxu0 0
      %847 = vmatpush1.bf16.xpose.msra.mxu0 0
      %848 = vmatprep.subr.bf16.mxu0 0
      %849 = vmatpush1.bf16.xpose.msra.mxu0 0
      %850 = vmatprep.subr.bf16.mxu0 0
      %851 = vmatpush1.bf16.xpose.msra.mxu0 0
      %852 = vmatprep.subr.bf16.mxu0 0
      %853 = vmatpush1.bf16.xpose.msra.mxu0 0
      %854 = vmatprep.subr.bf16.mxu0 0
      %855 = vmatpush1.bf16.xpose.msra.mxu0 0
      %856 = vmatprep.subr.bf16.mxu0 0
      %857 = vmatpush1.bf16.xpose.msra.mxu0 0
      %858 = vmatprep.mubr.bf16.mxu0 0
      %859 = vmatmul.mubr.bf16.gmra.mrb[0].mxu0 %v821
      %v860 = vpop.f32.mrb[0].mxu0
      %v861 = vadd.f32 0.0, %v860
      %v862 = vpop.f32.mrb[0].mxu0
      %v863 = vpop.f32.mrb[0].mxu0
      %v864 = vpop.f32.mrb[0].mxu0
      %865 = vdwg.mxu0
      %vm866 = vcmask 36864
      %v867 = vsel %vm866, %v861, -inf
      %868 = vmax.xlane.f32.xlu0 %v867
      %v869 = vpop.xlane.xlu0 %868
      %v870 = vsub.f32 %v861, %v869
      %v871 = vmul.f32 %v870, 1.442695
      %v872 = vpow.pop %v871
      %v873 = vsel %vm866, %v872, 0.0
      %874 = vadd.xlane.f32.xlu0 %v873
      %v875 = vpop.xlane.xlu0 %874
      %v876 = vrcp.pop %v875
      %v877 = vmul.f32 %v872, %v876
      %v878 = vpack.c.bf16 %v877, %v877
      %879 = vrot.lane.b32.xlu0 %v815, 64
      %v880 = vpop.permute.xlu0 %879
      %vm881 = vcmask 39936
      %v883 = vsel %vm881, %v878, 0
      %vm885 = vcmask 1041408
      %vm886 = vcmask 1042432
      %v887 = vsel %vm885, 4294967295, 65535
      %v888 = vsel %vm886, %v887, 0
      %v890 = vand.u32 %v880, %v888
      %892 = vmatprep.subr.bf16.mxu0 0
      %893 = vmatpush1.bf16.msra.mxu0 %v890
      %894 = vmatprep.subr.bf16.mxu0 0
      %895 = vmatpush1.bf16.msra.mxu0 0
      %896 = vmatprep.subr.bf16.mxu0 0
      %897 = vmatpush1.bf16.msra.mxu0 0
      %898 = vmatprep.subr.bf16.mxu0 0
      %899 = vmatpush1.bf16.msra.mxu0 0
      %900 = vmatprep.subr.bf16.mxu0 0
      %901 = vmatpush1.bf16.msra.mxu0 0
      %902 = vmatprep.subr.bf16.mxu0 0
      %903 = vmatpush1.bf16.msra.mxu0 0
      %904 = vmatprep.subr.bf16.mxu0 0
      %905 = vmatpush1.bf16.msra.mxu0 0
      %906 = vmatprep.subr.bf16.mxu0 0
      %907 = vmatpush1.bf16.msra.mxu0 0
      %908 = vmatprep.subr.bf16.mxu0 0
      %909 = vmatpush1.bf16.msra.mxu0 0
      %910 = vmatprep.subr.bf16.mxu0 0
      %911 = vmatpush1.bf16.msra.mxu0 0
      %912 = vmatprep.subr.bf16.mxu0 0
      %913 = vmatpush1.bf16.msra.mxu0 0
      %914 = vmatprep.subr.bf16.mxu0 0
      %915 = vmatpush1.bf16.msra.mxu0 0
      %916 = vmatprep.subr.bf16.mxu0 0
      %917 = vmatpush1.bf16.msra.mxu0 0
      %918 = vmatprep.subr.bf16.mxu0 0
      %919 = vmatpush1.bf16.msra.mxu0 0
      %920 = vmatprep.subr.bf16.mxu0 0
      %921 = vmatpush1.bf16.msra.mxu0 0
      %922 = vmatprep.subr.bf16.mxu0 0
      %923 = vmatpush1.bf16.msra.mxu0 0
      %924 = vmatprep.mubr.bf16.mxu0 0
      %925 = vmatmul.mubr.bf16.gmra.mrb[0].mxu0 %v883
      %v926 = vpop.f32.mrb[0].mxu0
      %v927 = vadd.f32 0.0, %v926
      %v928 = vpop.f32.mrb[0].mxu0
      %v929 = vpop.f32.mrb[0].mxu0
      %v930 = vpop.f32.mrb[0].mxu0
      %931 = vdwg.mxu0
      %932 = vrot.lane.b32.xlu0 %v815, 120
      %v933 = vpop.permute.xlu0 %932
      %934 = vrot.lane.b32.xlu0 %v815, 88
      %v935 = vpop.permute.xlu0 %934
      %v937 = vsel %vm819, %v933, 0
      %v940 = vsel %vm819, %v935, 0
      %942 = vmatprep.subr.bf16.mxu0 0
      %943 = vmatpush1.bf16.xpose.msra.mxu0 %v940
      %944 = vmatprep.subr.bf16.mxu0 0
      %945 = vmatpush1.bf16.xpose.msra.mxu0 0
      %946 = vmatprep.subr.bf16.mxu0 0
      %947 = vmatpush1.bf16.xpose.msra.mxu0 0
      %948 = vmatprep.subr.bf16.mxu0 0
      %949 = vmatpush1.bf16.xpose.msra.mxu0 0
      %950 = vmatprep.subr.bf16.mxu0 0
      %951 = vmatpush1.bf16.xpose.msra.mxu0 0
      %952 = vmatprep.subr.bf16.mxu0 0
      %953 = vmatpush1.bf16.xpose.msra.mxu0 0
      %954 = vmatprep.subr.bf16.mxu0 0
      %955 = vmatpush1.bf16.xpose.msra.mxu0 0
      %956 = vmatprep.subr.bf16.mxu0 0
      %957 = vmatpush1.bf16.xpose.msra.mxu0 0
      %958 = vmatprep.subr.bf16.mxu0 0
      %959 = vmatpush1.bf16.xpose.msra.mxu0 0
      %960 = vmatprep.subr.bf16.mxu0 0
      %961 = vmatpush1.bf16.xpose.msra.mxu0 0
      %962 = vmatprep.subr.bf16.mxu0 0
      %963 = vmatpush1.bf16.xpose.msra.mxu0 0
      %964 = vmatprep.subr.bf16.mxu0 0
      %965 = vmatpush1.bf16.xpose.msra.mxu0 0
      %966 = vmatprep.subr.bf16.mxu0 0
      %967 = vmatpush1.bf16.xpose.msra.mxu0 0
      %968 = vmatprep.subr.bf16.mxu0 0
      %969 = vmatpush1.bf16.xpose.msra.mxu0 0
      %970 = vmatprep.subr.bf16.mxu0 0
      %971 = vmatpush1.bf16.xpose.msra.mxu0 0
      %972 = vmatprep.subr.bf16.mxu0 0
      %973 = vmatpush1.bf16.xpose.msra.mxu0 0
      %974 = vmatprep.mubr.bf16.mxu0 0
      %975 = vmatmul.mubr.bf16.gmra.mrb[0].mxu0 %v937
      %v976 = vpop.f32.mrb[0].mxu0
      %v977 = vadd.f32 0.0, %v976
      %v978 = vpop.f32.mrb[0].mxu0
      %v979 = vpop.f32.mrb[0].mxu0
      %v980 = vpop.f32.mrb[0].mxu0
      %981 = vdwg.mxu0
      %v982 = vsel %vm866, %v977, -inf
      %983 = vmax.xlane.f32.xlu0 %v982
      %v984 = vpop.xlane.xlu0 %983
      %v985 = vsub.f32 %v977, %v984
      %v986 = vmul.f32 %v985, 1.442695
      %v987 = vpow.pop %v986
      %v988 = vsel %vm866, %v987, 0.0
      %989 = vadd.xlane.f32.xlu0 %v988
      %v990 = vpop.xlane.xlu0 %989
      %v991 = vrcp.pop %v990
      %v992 = vmul.f32 %v987, %v991
      %v993 = vpack.c.bf16 %v992, %v992
      %994 = vrot.lane.b32.xlu0 %v815, 56
      %v995 = vpop.permute.xlu0 %994
      %v997 = vsel %vm881, %v993, 0
      %v1000 = vand.u32 %v995, %v888
      %1002 = vmatprep.subr.bf16.mxu0 0
      %1003 = vmatpush1.bf16.msra.mxu0 %v1000
      %1004 = vmatprep.subr.bf16.mxu0 0
      %1005 = vmatpush1.bf16.msra.mxu0 0
      %1006 = vmatprep.subr.bf16.mxu0 0
      %1007 = vmatpush1.bf16.msra.mxu0 0
      %1008 = vmatprep.subr.bf16.mxu0 0
      %1009 = vmatpush1.bf16.msra.mxu0 0
      %1010 = vmatprep.subr.bf16.mxu0 0
      %1011 = vmatpush1.bf16.msra.mxu0 0
      %1012 = vmatprep.subr.bf16.mxu0 0
      %1013 = vmatpush1.bf16.msra.mxu0 0
      %1014 = vmatprep.subr.bf16.mxu0 0
      %1015 = vmatpush1.bf16.msra.mxu0 0
      %1016 = vmatprep.subr.bf16.mxu0 0
      %1017 = vmatpush1.bf16.msra.mxu0 0
      %1018 = vmatprep.subr.bf16.mxu0 0
      %1019 = vmatpush1.bf16.msra.mxu0 0
      %1020 = vmatprep.subr.bf16.mxu0 0
      %1021 = vmatpush1.bf16.msra.mxu0 0
      %1022 = vmatprep.subr.bf16.mxu0 0
      %1023 = vmatpush1.bf16.msra.mxu0 0
      %1024 = vmatprep.subr.bf16.mxu0 0
      %1025 = vmatpush1.bf16.msra.mxu0 0
      %1026 = vmatprep.subr.bf16.mxu0 0
      %1027 = vmatpush1.bf16.msra.mxu0 0
      %1028 = vmatprep.subr.bf16.mxu0 0
      %1029 = vmatpush1.bf16.msra.mxu0 0
      %1030 = vmatprep.subr.bf16.mxu0 0
      %1031 = vmatpush1.bf16.msra.mxu0 0
      %1032 = vmatprep.subr.bf16.mxu0 0
      %1033 = vmatpush1.bf16.msra.mxu0 0
      %1034 = vmatprep.mubr.bf16.mxu0 0
      %1035 = vmatmul.mubr.bf16.gmra.mrb[0].mxu0 %v997
      %v1036 = vpop.f32.mrb[0].mxu0
      %v1037 = vadd.f32 0.0, %v1036
      %v1038 = vpop.f32.mrb[0].mxu0
      %v1039 = vpop.f32.mrb[0].mxu0
      %v1040 = vpop.f32.mrb[0].mxu0
      %1041 = vdwg.mxu0
      %1042 = vrot.lane.b32.xlu0 %v815, 112
      %v1043 = vpop.permute.xlu0 %1042
      %1044 = vrot.lane.b32.xlu0 %v815, 80
      %v1045 = vpop.permute.xlu0 %1044
      %v1047 = vsel %vm819, %v1043, 0
      %v1050 = vsel %vm819, %v1045, 0
      %1052 = vmatprep.subr.bf16.mxu0 0
      %1053 = vmatpush1.bf16.xpose.msra.mxu0 %v1050
      %1054 = vmatprep.subr.bf16.mxu0 0
      %1055 = vmatpush1.bf16.xpose.msra.mxu0 0
      %1056 = vmatprep.subr.bf16.mxu0 0
      %1057 = vmatpush1.bf16.xpose.msra.mxu0 0
      %1058 = vmatprep.subr.bf16.mxu0 0
      %1059 = vmatpush1.bf16.xpose.msra.mxu0 0
      %1060 = vmatprep.subr.bf16.mxu0 0
      %1061 = vmatpush1.bf16.xpose.msra.mxu0 0
      %1062 = vmatprep.subr.bf16.mxu0 0
      %1063 = vmatpush1.bf16.xpose.msra.mxu0 0
      %1064 = vmatprep.subr.bf16.mxu0 0
      %1065 = vmatpush1.bf16.xpose.msra.mxu0 0
      %1066 = vmatprep.subr.bf16.mxu0 0
      %1067 = vmatpush1.bf16.xpose.msra.mxu0 0
      %1068 = vmatprep.subr.bf16.mxu0 0
      %1069 = vmatpush1.bf16.xpose.msra.mxu0 0
      %1070 = vmatprep.subr.bf16.mxu0 0
      %1071 = vmatpush1.bf16.xpose.msra.mxu0 0
      %1072 = vmatprep.subr.bf16.mxu0 0
      %1073 = vmatpush1.bf16.xpose.msra.mxu0 0
      %1074 = vmatprep.subr.bf16.mxu0 0
      %1075 = vmatpush1.bf16.xpose.msra.mxu0 0
      %1076 = vmatprep.subr.bf16.mxu0 0
      %1077 = vmatpush1.bf16.xpose.msra.mxu0 0
      %1078 = vmatprep.subr.bf16.mxu0 0
      %1079 = vmatpush1.bf16.xpose.msra.mxu0 0
      %1080 = vmatprep.subr.bf16.mxu0 0
      %1081 = vmatpush1.bf16.xpose.msra.mxu0 0
      %1082 = vmatprep.subr.bf16.mxu0 0
      %1083 = vmatpush1.bf16.xpose.msra.mxu0 0
      %1084 = vmatprep.mubr.bf16.mxu0 0
      %1085 = vmatmul.mubr.bf16.gmra.mrb[0].mxu0 %v1047
      %v1086 = vpop.f32.mrb[0].mxu0
      %v1087 = vadd.f32 0.0, %v1086
      %v1088 = vpop.f32.mrb[0].mxu0
      %v1089 = vpop.f32.mrb[0].mxu0
      %v1090 = vpop.f32.mrb[0].mxu0
      %1091 = vdwg.mxu0
      %v1092 = vsel %vm866, %v1087, -inf
      %1093 = vmax.xlane.f32.xlu0 %v1092
      %v1094 = vpop.xlane.xlu0 %1093
      %v1095 = vsub.f32 %v1087, %v1094
      %v1096 = vmul.f32 %v1095, 1.442695
      %v1097 = vpow.pop %v1096
      %v1098 = vsel %vm866, %v1097, 0.0
      %1099 = vadd.xlane.f32.xlu0 %v1098
      %v1100 = vpop.xlane.xlu0 %1099
      %v1101 = vrcp.pop %v1100
      %v1102 = vmul.f32 %v1097, %v1101
      %v1103 = vpack.c.bf16 %v1102, %v1102
      %1104 = vrot.lane.b32.xlu0 %v815, 48
      %v1105 = vpop.permute.xlu0 %1104
      %v1107 = vsel %vm881, %v1103, 0
      %v1110 = vand.u32 %v1105, %v888
      %1112 = vmatprep.subr.bf16.mxu0 0
      %1113 = vmatpush1.bf16.msra.mxu0 %v1110
      %1114 = vmatprep.subr.bf16.mxu0 0
      %1115 = vmatpush1.bf16.msra.mxu0 0
      %1116 = vmatprep.subr.bf16.mxu0 0
      %1117 = vmatpush1.bf16.msra.mxu0 0
      %1118 = vmatprep.subr.bf16.mxu0 0
      %1119 = vmatpush1.bf16.msra.mxu0 0
      %1120 = vmatprep.subr.bf16.mxu0 0
      %1121 = vmatpush1.bf16.msra.mxu0 0
      %1122 = vmatprep.subr.bf16.mxu0 0
      %1123 = vmatpush1.bf16.msra.mxu0 0
      %1124 = vmatprep.subr.bf16.mxu0 0
      %1125 = vmatpush1.bf16.msra.mxu0 0
      %1126 = vmatprep.subr.bf16.mxu0 0
      %1127 = vmatpush1.bf16.msra.mxu0 0
      %1128 = vmatprep.subr.bf16.mxu0 0
      %1129 = vmatpush1.bf16.msra.mxu0 0
      %1130 = vmatprep.subr.bf16.mxu0 0
      %1131 = vmatpush1.bf16.msra.mxu0 0
      %1132 = vmatprep.subr.bf16.mxu0 0
      %1133 = vmatpush1.bf16.msra.mxu0 0
      %1134 = vmatprep.subr.bf16.mxu0 0
      %1135 = vmatpush1.bf16.msra.mxu0 0
      %1136 = vmatprep.subr.bf16.mxu0 0
      %1137 = vmatpush1.bf16.msra.mxu0 0
      %1138 = vmatprep.subr.bf16.mxu0 0
      %1139 = vmatpush1.bf16.msra.mxu0 0
      %1140 = vmatprep.subr.bf16.mxu0 0
      %1141 = vmatpush1.bf16.msra.mxu0 0
      %1142 = vmatprep.subr.bf16.mxu0 0
      %1143 = vmatpush1.bf16.msra.mxu0 0
      %1144 = vmatprep.mubr.bf16.mxu0 0
      %1145 = vmatmul.mubr.bf16.gmra.mrb[0].mxu0 %v1107
      %v1146 = vpop.f32.mrb[0].mxu0
      %v1147 = vadd.f32 0.0, %v1146
      %v1148 = vpop.f32.mrb[0].mxu0
      %v1149 = vpop.f32.mrb[0].mxu0
      %v1150 = vpop.f32.mrb[0].mxu0
      %1151 = vdwg.mxu0
      %1152 = vrot.lane.b32.xlu0 %v815, 104
      %v1153 = vpop.permute.xlu0 %1152
      %1154 = vrot.lane.b32.xlu0 %v815, 72
      %v1155 = vpop.permute.xlu0 %1154
      %v1157 = vsel %vm819, %v1153, 0
      %v1160 = vsel %vm819, %v1155, 0
      %1162 = vmatprep.subr.bf16.mxu0 0
      %1163 = vmatpush1.bf16.xpose.msra.mxu0 %v1160
      %1164 = vmatprep.subr.bf16.mxu0 0
      %1165 = vmatpush1.bf16.xpose.msra.mxu0 0
      %1166 = vmatprep.subr.bf16.mxu0 0
      %1167 = vmatpush1.bf16.xpose.msra.mxu0 0
      %1168 = vmatprep.subr.bf16.mxu0 0
      %1169 = vmatpush1.bf16.xpose.msra.mxu0 0
      %1170 = vmatprep.subr.bf16.mxu0 0
      %1171 = vmatpush1.bf16.xpose.msra.mxu0 0
      %1172 = vmatprep.subr.bf16.mxu0 0
      %1173 = vmatpush1.bf16.xpose.msra.mxu0 0
      %1174 = vmatprep.subr.bf16.mxu0 0
      %1175 = vmatpush1.bf16.xpose.msra.mxu0 0
      %1176 = vmatprep.subr.bf16.mxu0 0
      %1177 = vmatpush1.bf16.xpose.msra.mxu0 0
      %1178 = vmatprep.subr.bf16.mxu0 0
      %1179 = vmatpush1.bf16.xpose.msra.mxu0 0
      %1180 = vmatprep.subr.bf16.mxu0 0
      %1181 = vmatpush1.bf16.xpose.msra.mxu0 0
      %1182 = vmatprep.subr.bf16.mxu0 0
      %1183 = vmatpush1.bf16.xpose.msra.mxu0 0
      %1184 = vmatprep.subr.bf16.mxu0 0
      %1185 = vmatpush1.bf16.xpose.msra.mxu0 0
      %1186 = vmatprep.subr.bf16.mxu0 0
      %1187 = vmatpush1.bf16.xpose.msra.mxu0 0
      %1188 = vmatprep.subr.bf16.mxu0 0
      %1189 = vmatpush1.bf16.xpose.msra.mxu0 0
      %1190 = vmatprep.subr.bf16.mxu0 0
      %1191 = vmatpush1.bf16.xpose.msra.mxu0 0
      %1192 = vmatprep.subr.bf16.mxu0 0
      %1193 = vmatpush1.bf16.xpose.msra.mxu0 0
      %1194 = vmatprep.mubr.bf16.mxu0 0
      %1195 = vmatmul.mubr.bf16.gmra.mrb[0].mxu0 %v1157
      %v1196 = vpop.f32.mrb[0].mxu0
      %v1197 = vadd.f32 0.0, %v1196
      %v1198 = vpop.f32.mrb[0].mxu0
      %v1199 = vpop.f32.mrb[0].mxu0
      %v1200 = vpop.f32.mrb[0].mxu0
      %1201 = vdwg.mxu0
      %v1202 = vsel %vm866, %v1197, -inf
      %1203 = vmax.xlane.f32.xlu0 %v1202
      %v1204 = vpop.xlane.xlu0 %1203
      %v1205 = vsub.f32 %v1197, %v1204
      %v1206 = vmul.f32 %v1205, 1.442695
      %v1207 = vpow.pop %v1206
      %v1208 = vsel %vm866, %v1207, 0.0
      %1209 = vadd.xlane.f32.xlu0 %v1208
      %v1210 = vpop.xlane.xlu0 %1209
      %v1211 = vrcp.pop %v1210
      %v1212 = vmul.f32 %v1207, %v1211
      %v1213 = vpack.c.bf16 %v1212, %v1212
      %1214 = vrot.lane.b32.xlu0 %v815, 40
      %v1215 = vpop.permute.xlu0 %1214
      %v1217 = vsel %vm881, %v1213, 0
      %v1220 = vand.u32 %v1215, %v888
      %1222 = vmatprep.subr.bf16.mxu0 0
      %1223 = vmatpush1.bf16.msra.mxu0 %v1220
      %1224 = vmatprep.subr.bf16.mxu0 0
      %1225 = vmatpush1.bf16.msra.mxu0 0
      %1226 = vmatprep.subr.bf16.mxu0 0
      %1227 = vmatpush1.bf16.msra.mxu0 0
      %1228 = vmatprep.subr.bf16.mxu0 0
      %1229 = vmatpush1.bf16.msra.mxu0 0
      %1230 = vmatprep.subr.bf16.mxu0 0
      %1231 = vmatpush1.bf16.msra.mxu0 0
      %1232 = vmatprep.subr.bf16.mxu0 0
      %1233 = vmatpush1.bf16.msra.mxu0 0
      %1234 = vmatprep.subr.bf16.mxu0 0
      %1235 = vmatpush1.bf16.msra.mxu0 0
      %1236 = vmatprep.subr.bf16.mxu0 0
      %1237 = vmatpush1.bf16.msra.mxu0 0
      %1238 = vmatprep.subr.bf16.mxu0 0
      %1239 = vmatpush1.bf16.msra.mxu0 0
      %1240 = vmatprep.subr.bf16.mxu0 0
      %1241 = vmatpush1.bf16.msra.mxu0 0
      %1242 = vmatprep.subr.bf16.mxu0 0
      %1243 = vmatpush1.bf16.msra.mxu0 0
      %1244 = vmatprep.subr.bf16.mxu0 0
      %1245 = vmatpush1.bf16.msra.mxu0 0
      %1246 = vmatprep.subr.bf16.mxu0 0
      %1247 = vmatpush1.bf16.msra.mxu0 0
      %1248 = vmatprep.subr.bf16.mxu0 0
      %1249 = vmatpush1.bf16.msra.mxu0 0
      %1250 = vmatprep.subr.bf16.mxu0 0
      %1251 = vmatpush1.bf16.msra.mxu0 0
      %1252 = vmatprep.subr.bf16.mxu0 0
      %1253 = vmatpush1.bf16.msra.mxu0 0
      %1254 = vmatprep.mubr.bf16.mxu0 0
      %1255 = vmatmul.mubr.bf16.gmra.mrb[0].mxu0 %v1217
      %v1256 = vpop.f32.mrb[0].mxu0
      %v1257 = vadd.f32 0.0, %v1256
      %v1258 = vpop.f32.mrb[0].mxu0
      %v1259 = vpop.f32.mrb[0].mxu0
      %v1260 = vpop.f32.mrb[0].mxu0
      %1261 = vdwg.mxu0
      %1263 = vrot.lane.b32.xlu0 %v1037, 8
      %v1264 = vpop.permute.xlu0 %1263
      %1267 = vrot.lane.b32.xlu0 %v1147, 16
      %v1268 = vpop.permute.xlu0 %1267
      %1271 = vrot.lane.b32.xlu0 %v1257, 24
      %v1272 = vpop.permute.xlu0 %1271
      %v1274 = vsel %vm819, %v927, %v1264
      %vm1275 = vcmask 130048
      %v1276 = vsel %vm1275, %v1274, %v1268
      %vm1277 = vcmask 195584
      %v1278 = vsel %vm1277, %v1276, %v1272
      %v1279 = vld [vmem:[%s7] sm:$0xf]
      %v1280 = vld [vmem:[%s7 + $0x4] sm:$0xf]
      %v1281 = vld [vmem:[%s7 + $0x8] sm:$0xf]
      %v1282 = vld [vmem:[%s7 + $0xc] sm:$0xf]
      %v1283 = vld [vmem:[%s8] sm:$0x1]
      %v1284 = vpack.c.bf16 %v1278, %v1278
      %v1286 = vlaneseq
      %v1287 = vshrl.u32 %v1286, 7
      %v1288 = vsub.s32 0, %v1287
      %v1289 = vrot.slane %v1283, %v1288
      %v1295 = vunpack.c.l.b16 %v1279
      %v1296 = vunpack.c.l.b16 %v1280
      %v1297 = vunpack.c.l.b16 %v1281
      %v1298 = vunpack.c.l.b16 %v1282
      %v1299 = vpack.c.b16 %v1296, %v1295
      %v1300 = vpack.c.b16 %v1298, %v1297
      %v1304 = vsel %vm771, %v1284, 0
      %1306 = vmatprep.subr.bf16.mxu0 0
      %1307 = vmatpush1.bf16.msra.mxu0 %v1299
      %1308 = vmatprep.subr.bf16.mxu0 0
      %1309 = vmatpush1.bf16.msra.mxu0 %v1300
      %1310 = vmatprep.subr.bf16.mxu0 0
      %1311 = vmatpush1.bf16.msra.mxu0 0
      %1312 = vmatprep.subr.bf16.mxu0 0
      %1313 = vmatpush1.bf16.msra.mxu0 0
      %1314 = vmatprep.subr.bf16.mxu0 0
      %1315 = vmatpush1.bf16.msra.mxu0 0
      %1316 = vmatprep.subr.bf16.mxu0 0
      %1317 = vmatpush1.bf16.msra.mxu0 0
      %1318 = vmatprep.subr.bf16.mxu0 0
      %1319 = vmatpush1.bf16.msra.mxu0 0
      %1320 = vmatprep.subr.bf16.mxu0 0
      %1321 = vmatpush1.bf16.msra.mxu0 0
      %1322 = vmatprep.subr.bf16.mxu0 0
      %1323 = vmatpush1.bf16.msra.mxu0 0
      %1324 = vmatprep.subr.bf16.mxu0 0
      %1325 = vmatpush1.bf16.msra.mxu0 0
      %1326 = vmatprep.subr.bf16.mxu0 0
      %1327 = vmatpush1.bf16.msra.mxu0 0
      %1328 = vmatprep.subr.bf16.mxu0 0
      %1329 = vmatpush1.bf16.msra.mxu0 0
      %1330 = vmatprep.subr.bf16.mxu0 0
      %1331 = vmatpush1.bf16.msra.mxu0 0
      %1332 = vmatprep.subr.bf16.mxu0 0
      %1333 = vmatpush1.bf16.msra.mxu0 0
      %1334 = vmatprep.subr.bf16.mxu0 0
      %1335 = vmatpush1.bf16.msra.mxu0 0
      %1336 = vmatprep.subr.bf16.mxu0 0
      %1337 = vmatpush1.bf16.msra.mxu0 0
      %1338 = vmatprep.mubr.bf16.mxu0 0
      %1339 = vmatmul.mubr.bf16.gmra.mrb[0].mxu0 %v1304
      %v1340 = vpop.f32.mrb[0].mxu0
      %v1341 = vadd.f32 %v1289, %v1340
      %v1342 = vpop.f32.mrb[0].mxu0
      %v1343 = vpop.f32.mrb[0].mxu0
      %v1344 = vpop.f32.mrb[0].mxu0
      %1345 = vdwg.mxu0
      %v1346 = vadd.f32 %v733, %v1341
      %v1347 = vsel %vm705, %v1346, 0.0
      %1348 = vadd.xlane.f32.xlu0 %v1347
      %v1349 = vpop.xlane.xlu0 %1348
      %v1350 = vmul.f32 %v1349, %v709
      %v1351 = vsub.f32 %v1346, %v1350
      %v1352 = vmul.f32 %v1351, %v1351
      %v1353 = vsel %vm705, %v1352, 0.0
      %1354 = vadd.xlane.f32.xlu0 %v1353
      %v1355 = vpop.xlane.xlu0 %1354
      %v1356 = vmul.f32 %v1355, %v709
      %v1357 = vadd.f32 %v1356, 1e-05
      %v1358 = vrsqrt.pop %v1357
      %v1359 = vmul.f32 %v1351, %v1358
      %v1360 = vld [vmem:[%s9] sm:$0xf]
      %v1361 = vld [vmem:[%s9 + $0x4] sm:$0xf]
      %v1362 = vld [vmem:[%s9 + $0x8] sm:$0xf]
      %v1363 = vld [vmem:[%s9 + $0xc] sm:$0xf]
      %v1364 = vld [vmem:[%s10] sm:$0x1]
      %v1365 = vpack.c.bf16 %v1359, %v1359
      %v1367 = vlaneseq
      %v1368 = vshrl.u32 %v1367, 7
      %v1369 = vsub.s32 0, %v1368
      %v1370 = vrot.slane %v1364, %v1369
      %v1376 = vunpack.c.l.b16 %v1360
      %v1377 = vunpack.c.l.b16 %v1361
      %v1378 = vunpack.c.l.b16 %v1362
      %v1379 = vunpack.c.l.b16 %v1363
      %v1380 = vpack.c.b16 %v1377, %v1376
      %v1381 = vpack.c.b16 %v1379, %v1378
      %v1385 = vsel %vm771, %v1365, 0
      %1387 = vmatprep.subr.bf16.mxu0 0
      %1388 = vmatpush1.bf16.msra.mxu0 %v1380
      %1389 = vmatprep.subr.bf16.mxu0 0
      %1390 = vmatpush1.bf16.msra.mxu0 %v1381
      %1391 = vmatprep.subr.bf16.mxu0 0
      %1392 = vmatpush1.bf16.msra.mxu0 0
      %1393 = vmatprep.subr.bf16.mxu0 0
      %1394 = vmatpush1.bf16.msra.mxu0 0
      %1395 = vmatprep.subr.bf16.mxu0 0
      %1396 = vmatpush1.bf16.msra.mxu0 0
      %1397 = vmatprep.subr.bf16.mxu0 0
      %1398 = vmatpush1.bf16.msra.mxu0 0
      %1399 = vmatprep.subr.bf16.mxu0 0
      %1400 = vmatpush1.bf16.msra.mxu0 0
      %1401 = vmatprep.subr.bf16.mxu0 0
      %1402 = vmatpush1.bf16.msra.mxu0 0
      %1403 = vmatprep.subr.bf16.mxu0 0
      %1404 = vmatpush1.bf16.msra.mxu0 0
      %1405 = vmatprep.subr.bf16.mxu0 0
      %1406 = vmatpush1.bf16.msra.mxu0 0
      %1407 = vmatprep.subr.bf16.mxu0 0
      %1408 = vmatpush1.bf16.msra.mxu0 0
      %1409 = vmatprep.subr.bf16.mxu0 0
      %1410 = vmatpush1.bf16.msra.mxu0 0
      %1411 = vmatprep.subr.bf16.mxu0 0
      %1412 = vmatpush1.bf16.msra.mxu0 0
      %1413 = vmatprep.subr.bf16.mxu0 0
      %1414 = vmatpush1.bf16.msra.mxu0 0
      %1415 = vmatprep.subr.bf16.mxu0 0
      %1416 = vmatpush1.bf16.msra.mxu0 0
      %1417 = vmatprep.subr.bf16.mxu0 0
      %1418 = vmatpush1.bf16.msra.mxu0 0
      %1419 = vmatprep.mubr.bf16.mxu0 0
      %1420 = vmatmul.mubr.bf16.gmra.mrb[0].mxu0 %v1385
      %v1421 = vpop.f32.mrb[0].mxu0
      %v1422 = vadd.f32 %v1370, %v1421
      %v1423 = vpop.f32.mrb[0].mxu0
      %v1424 = vpop.f32.mrb[0].mxu0
      %v1425 = vpop.f32.mrb[0].mxu0
      %1426 = vdwg.mxu0
      %v1427 = vmul.f32 %v1422, 1.702
      %v1428 = vxor.u32 %v1427, 2147483648
      %v1429 = vmul.f32 %v1428, 1.442695
      %v1430 = vpow.pop %v1429
      %v1431 = vadd.f32 %v1430, 1.0
      %v1432 = vrcp.pop %v1431
      %v1433 = vmul.f32 1.0, %v1432
      %v1434 = vmul.f32 %v1422, %v1433
      %v1435 = vld [vmem:[%s11] sm:$0xf]
      %v1436 = vld [vmem:[%s11 + $0x4] sm:$0xf]
      %v1437 = vld [vmem:[%s11 + $0x8] sm:$0xf]
      %v1438 = vld [vmem:[%s11 + $0xc] sm:$0xf]
      %v1439 = vld [vmem:[%s11 + $0x10] sm:$0xf]
      %v1440 = vld [vmem:[%s11 + $0x14] sm:$0xf]
      %v1441 = vld [vmem:[%s11 + $0x18] sm:$0xf]
      %v1442 = vld [vmem:[%s11 + $0x1c] sm:$0xf]
      %v1443 = vld [vmem:[%s12] sm:$0x1]
      %v1444 = vpack.c.bf16 %v1434, %v1434
      %v1446 = vlaneseq
      %v1447 = vshrl.u32 %v1446, 7
      %v1448 = vsub.s32 0, %v1447
      %v1449 = vrot.slane %v1443, %v1448
      %v1459 = vunpack.c.l.b16 %v1435
      %v1460 = vunpack.c.l.b16 %v1436
      %v1461 = vunpack.c.l.b16 %v1437
      %v1462 = vunpack.c.l.b16 %v1438
      %v1463 = vunpack.c.l.b16 %v1439
      %v1464 = vunpack.c.l.b16 %v1440
      %v1465 = vunpack.c.l.b16 %v1441
      %v1466 = vunpack.c.l.b16 %v1442
      %v1467 = vpack.c.b16 %v1460, %v1459
      %v1468 = vpack.c.b16 %v1462, %v1461
      %v1469 = vpack.c.b16 %v1464, %v1463
      %v1470 = vpack.c.b16 %v1466, %v1465
      %vm1475 = vcmask 523264
      %v1477 = vsel %vm1475, %v1444, 0
      %1479 = vmatprep.subr.bf16.mxu0 0
      %1480 = vmatpush1.bf16.msra.mxu0 %v1467
      %1481 = vmatprep.subr.bf16.mxu0 0
      %1482 = vmatpush1.bf16.msra.mxu0 %v1468
      %1483 = vmatprep.subr.bf16.mxu0 0
      %1484 = vmatpush1.bf16.msra.mxu0 %v1469
      %1485 = vmatprep.subr.bf16.mxu0 0
      %1486 = vmatpush1.bf16.msra.mxu0 %v1470
      %1487 = vmatprep.subr.bf16.mxu0 0
      %1488 = vmatpush1.bf16.msra.mxu0 0
      %1489 = vmatprep.subr.bf16.mxu0 0
      %1490 = vmatpush1.bf16.msra.mxu0 0
      %1491 = vmatprep.subr.bf16.mxu0 0
      %1492 = vmatpush1.bf16.msra.mxu0 0
      %1493 = vmatprep.subr.bf16.mxu0 0
      %1494 = vmatpush1.bf16.msra.mxu0 0
      %1495 = vmatprep.subr.bf16.mxu0 0
      %1496 = vmatpush1.bf16.msra.mxu0 0
      %1497 = vmatprep.subr.bf16.mxu0 0
      %1498 = vmatpush1.bf16.msra.mxu0 0
      %1499 = vmatprep.subr.bf16.mxu0 0
      %1500 = vmatpush1.bf16.msra.mxu0 0
      %1501 = vmatprep.subr.bf16.mxu0 0
      %1502 = vmatpush1.bf16.msra.mxu0 0
      %1503 = vmatprep.subr.bf16.mxu0 0
      %1504 = vmatpush1.bf16.msra.mxu0 0
      %1505 = vmatprep.subr.bf16.mxu0 0
      %1506 = vmatpush1.bf16.msra.mxu0 0
      %1507 = vmatprep.subr.bf16.mxu0 0
      %1508 = vmatpush1.bf16.msra.mxu0 0
      %1509 = vmatprep.subr.bf16.mxu0 0
      %1510 = vmatpush1.bf16.msra.mxu0 0
      %1511 = vmatprep.mubr.bf16.mxu0 0
      %1512 = vmatmul.mubr.bf16.gmra.mrb[0].mxu0 %v1477
      %v1513 = vpop.f32.mrb[0].mxu0
      %v1514 = vadd.f32 %v1449, %v1513
      %v1515 = vpop.f32.mrb[0].mxu0
      %v1516 = vpop.f32.mrb[0].mxu0
      %v1517 = vpop.f32.mrb[0].mxu0
      %1518 = vdwg.mxu0
      %v1519 = vadd.f32 %v1346, %v1514
      %v1520 = vld [vmem:[%s13] sm:$0xf]
      %v1521 = vld [vmem:[%s13 + $0x4] sm:$0xf]
      %v1522 = vld [vmem:[%s13 + $0x8] sm:$0xf]
      %v1523 = vld [vmem:[%s13 + $0xc] sm:$0xf]
      %v1524 = vld [vmem:[%s14] sm:$0x1]
      %v1525 = vpack.c.bf16 %v1519, %v1519
      %v1527 = vlaneseq
      %v1528 = vshrl.u32 %v1527, 7
      %v1529 = vsub.s32 0, %v1528
      %v1530 = vrot.slane %v1524, %v1529
      %v1536 = vunpack.c.l.b16 %v1520
      %v1537 = vunpack.c.l.b16 %v1521
      %v1538 = vunpack.c.l.b16 %v1522
      %v1539 = vunpack.c.l.b16 %v1523
      %v1540 = vpack.c.b16 %v1537, %v1536
      %v1541 = vpack.c.b16 %v1539, %v1538
      %v1545 = vsel %vm771, %v1525, 0
      %1547 = vmatprep.subr.bf16.mxu0 0
      %1548 = vmatpush1.bf16.msra.mxu0 %v1540
      %1549 = vmatprep.subr.bf16.mxu0 0
      %1550 = vmatpush1.bf16.msra.mxu0 %v1541
      %1551 = vmatprep.subr.bf16.mxu0 0
      %1552 = vmatpush1.bf16.msra.mxu0 0
      %1553 = vmatprep.subr.bf16.mxu0 0
      %1554 = vmatpush1.bf16.msra.mxu0 0
      %1555 = vmatprep.subr.bf16.mxu0 0
      %1556 = vmatpush1.bf16.msra.mxu0 0
      %1557 = vmatprep.subr.bf16.mxu0 0
      %1558 = vmatpush1.bf16.msra.mxu0 0
      %1559 = vmatprep.subr.bf16.mxu0 0
      %1560 = vmatpush1.bf16.msra.mxu0 0
      %1561 = vmatprep.subr.bf16.mxu0 0
      %1562 = vmatpush1.bf16.msra.mxu0 0
      %1563 = vmatprep.subr.bf16.mxu0 0
      %1564 = vmatpush1.bf16.msra.mxu0 0
      %1565 = vmatprep.subr.bf16.mxu0 0
      %1566 = vmatpush1.bf16.msra.mxu0 0
      %1567 = vmatprep.subr.bf16.mxu0 0
      %1568 = vmatpush1.bf16.msra.mxu0 0
      %1569 = vmatprep.subr.bf16.mxu0 0
      %1570 = vmatpush1.bf16.msra.mxu0 0
      %1571 = vmatprep.subr.bf16.mxu0 0
      %1572 = vmatpush1.bf16.msra.mxu0 0
      %1573 = vmatprep.subr.bf16.mxu0 0
      %1574 = vmatpush1.bf16.msra.mxu0 0
      %1575 = vmatprep.subr.bf16.mxu0 0
      %1576 = vmatpush1.bf16.msra.mxu0 0
      %1577 = vmatprep.subr.bf16.mxu0 0
      %1578 = vmatpush1.bf16.msra.mxu0 0
      %1579 = vmatprep.mubr.bf16.mxu0 0
      %1580 = vmatmul.mubr.bf16.gmra.mrb[0].mxu0 %v1545
      %v1581 = vpop.f32.mrb[0].mxu0
      %v1582 = vadd.f32 %v1530, %v1581
      %v1583 = vpop.f32.mrb[0].mxu0
      %v1584 = vpop.f32.mrb[0].mxu0
      %v1585 = vpop.f32.mrb[0].mxu0
      %1586 = vdwg.mxu0
      %v1587 = vmul.f32 %v1582, 0.5
      %v1588 = vmul.f32 %v1582, 0.70710677
      %v1589 = verf.f32.pop %v1588
      %v1590 = vadd.f32 %v1589, 1.0
      %v1591 = vmul.f32 %v1587, %v1590
      %v1592 = vld [vmem:[%s15] sm:$0xf]
      %v1593 = vld [vmem:[%s15 + $0x4] sm:$0xf]
      %v1594 = vld [vmem:[%s15 + $0x8] sm:$0xf]
      %v1595 = vld [vmem:[%s15 + $0xc] sm:$0xf]
      %v1596 = vld [vmem:[%s16] sm:$0x1]
      %v1597 = vpack.c.bf16 %v1591, %v1591
      %v1599 = vlaneseq
      %v1600 = vshrl.u32 %v1599, 7
      %v1601 = vsub.s32 0, %v1600
      %v1602 = vrot.slane %v1596, %v1601
      %v1608 = vunpack.c.l.b16 %v1592
      %v1609 = vunpack.c.l.b16 %v1593
      %v1610 = vunpack.c.l.b16 %v1594
      %v1611 = vunpack.c.l.b16 %v1595
      %v1612 = vpack.c.b16 %v1609, %v1608
      %v1613 = vpack.c.b16 %v1611, %v1610
      %v1617 = vsel %vm771, %v1597, 0
      %1619 = vmatprep.subr.bf16.mxu0 0
      %1620 = vmatpush1.bf16.msra.mxu0 %v1612
      %1621 = vmatprep.subr.bf16.mxu0 0
      %1622 = vmatpush1.bf16.msra.mxu0 %v1613
      %1623 = vmatprep.subr.bf16.mxu0 0
      %1624 = vmatpush1.bf16.msra.mxu0 0
      %1625 = vmatprep.subr.bf16.mxu0 0
      %1626 = vmatpush1.bf16.msra.mxu0 0
      %1627 = vmatprep.subr.bf16.mxu0 0
      %1628 = vmatpush1.bf16.msra.mxu0 0
      %1629 = vmatprep.subr.bf16.mxu0 0
      %1630 = vmatpush1.bf16.msra.mxu0 0
      %1631 = vmatprep.subr.bf16.mxu0 0
      %1632 = vmatpush1.bf16.msra.mxu0 0
      %1633 = vmatprep.subr.bf16.mxu0 0
      %1634 = vmatpush1.bf16.msra.mxu0 0
      %1635 = vmatprep.subr.bf16.mxu0 0
      %1636 = vmatpush1.bf16.msra.mxu0 0
      %1637 = vmatprep.subr.bf16.mxu0 0
      %1638 = vmatpush1.bf16.msra.mxu0 0
      %1639 = vmatprep.subr.bf16.mxu0 0
      %1640 = vmatpush1.bf16.msra.mxu0 0
      %1641 = vmatprep.subr.bf16.mxu0 0
      %1642 = vmatpush1.bf16.msra.mxu0 0
      %1643 = vmatprep.subr.bf16.mxu0 0
      %1644 = vmatpush1.bf16.msra.mxu0 0
      %1645 = vmatprep.subr.bf16.mxu0 0
      %1646 = vmatpush1.bf16.msra.mxu0 0
      %1647 = vmatprep.subr.bf16.mxu0 0
      %1648 = vmatpush1.bf16.msra.mxu0 0
      %1649 = vmatprep.subr.bf16.mxu0 0
      %1650 = vmatpush1.bf16.msra.mxu0 0
      %1651 = vmatprep.mubr.bf16.mxu0 0
      %1652 = vmatmul.mubr.bf16.gmra.mrb[0].mxu0 %v1617
      %v1653 = vpop.f32.mrb[0].mxu0
      %v1654 = vadd.f32 %v1602, %v1653
      %v1655 = vpop.f32.mrb[0].mxu0
      %v1656 = vpop.f32.mrb[0].mxu0
      %v1657 = vpop.f32.mrb[0].mxu0
      %1658 = vdwg.mxu0
      %1659 = vst [vmem:[%s546] sm:$0x1f] %v1654
      %p1660 = scmp.lt.s32.totalorder %s28, 1
      %s1661 = scalar_select %p1660, %s28, 1
      %s1662 = smul.addr %s1661, 8
      %s1663 = scalar_lea.vmem %s17, %s1662
      // Predicated region
      $region89: #{_forward_on_device.1} parent=87 // pred_check
        %p1664 = pneg %p408
      $region90: #{_forward_on_device.1} parent=87 // pred_check_branch
        %1666 = sbr.rel (%p1664) target = $region92
      $region91: #{_forward_on_device.1} parent=87 // pred_region
        _
      $region92: #{_forward_on_device.1} parent=87 // pred_fallthru
        _
    $region88: #{_forward_on_device.1} parent=5 // pred_fallthru
      _
    %p1667 = scmp.le.s32.totalorder 2, %s23
    // Predicated region
    $region93: #{_forward_on_device.1} parent=5 // pred_check
      %p1668 = pneg %p1667
    $region94: #{_forward_on_device.1} parent=5 // pred_check_branch
      %1670 = sbr.rel (%p1668) target = $region96
    $region95: #{_forward_on_device.1} parent=5 // pred_region
      %s1671 = ssub.s32 %s23, 2
      // Predicated region
      $region97: #{_forward_on_device.1} parent=95 // pred_check
        %p1672 = pneg %p414
      $region98: #{_forward_on_device.1} parent=95 // pred_check_branch
        %1674 = sbr.rel (%p1672) target = $region100
      $region99: #{_forward_on_device.1} parent=95 // pred_region
        %p1675 = scmp.lt.s32.totalorder %s29, 1
        %s1676 = scalar_select %p1675, %s29, 1
        %s1677 = smul.addr %s1676, 8
        %s1678 = scalar_lea.vmem %s17, %s1677
      $region100: #{_forward_on_device.1} parent=95 // pred_fallthru
        _
    $region96: #{_forward_on_device.1} parent=5 // pred_fallthru
      _
  $region6: #{_forward_on_device.1} parent=0 // loop_footer
    %s27 = sadd.s32 1, %s23
  $region7: #{_forward_on_device.1} parent=0 // loop_footer_branch
    %22 = sbr.rel target = $region3
  $region8: #{_forward_on_device.1} parent=0 // loop_exit
    _

</llo_original>
